<compile_context>
chip_gen: v7x
topology: tpu7x:2x2x1
jax: 0.10.0
libtpu: 0.0.40
codegen_flags: <defaults>
</compile_context>

<pallas_src>
import functools

import jax
import jax.numpy as jnp
from jax.experimental import pallas as pl
from jax.experimental.pallas import tpu as pltpu


def _conv_block_kernel(x_main_ref, x_halo_ref, w_ref, b_ref, o_ref, win_ref, *,
                       kh, kw, use_act, neg_slope):
    # x_main_ref: (1, TH,   Wp, Cin)        bf16 padded activation rows of this tile
    # x_halo_ref: (1, KH-1, Wp, Cin)        bf16 halo rows just below the tile
    # w_ref:      (KH*KW, Cin, Cout_pad)    bf16 per-tap weight matrices
    # b_ref:      (1, Cout_pad)             f32 bias
    # o_ref:      (1, TH, W_out, Cout_pad)  output tile (lane-dense last dim)
    # win_ref:    (TH+KH-1, Wp, Cin)        bf16 VMEM scratch (tile + halo, contiguous)
    th = x_main_ref.shape[1]
    halo = x_halo_ref.shape[1]
    cin = x_main_ref.shape[3]
    w_out = o_ref.shape[2]
    cout_pad = o_ref.shape[3]

    # Stage main + halo rows once into a contiguous window (1x tile bytes of stores,
    # instead of the previous ~KH*KW x im2col materialization).
    win_ref[:th] = x_main_ref[0]
    win_ref[th:th + halo] = x_halo_ref[0]

    # Per-tap matmuls: read shifted windows directly from the scratch ref (static
    # offsets -> plain offset vector loads, no concat / no patches buffer) and
    # accumulate the MXU results in f32.
    acc = jnp.zeros((th * w_out, cout_pad), jnp.float32)
    for i in range(kh):
        for j in range(kw):
            patch = win_ref[i:i + th, j:j + w_out, :]          # (TH, W_out, Cin)
            patch = patch.reshape(th * w_out, cin)
            acc = acc + jnp.dot(patch, w_ref[i * kw + j],
                                preferred_element_type=jnp.float32)

    acc = acc + b_ref[...]                                     # (1, Cout_pad) broadcast
    if use_act:
        acc = jnp.maximum(acc, neg_slope * acc)                # LeakyReLU(0.2)

    o_ref[...] = acc.reshape(1, th, w_out, cout_pad).astype(o_ref.dtype)


def _vmem_budgets():
    """(vmem_limit_bytes, row-tile budget) picked per TPU generation."""
    cap = 64 * 1024 * 1024  # conservative default (v7x-sized)
    try:
        info_fn = getattr(pltpu, "get_tpu_info", None)
        if info_fn is not None:
            cap = int(info_fn().vmem_capacity_bytes)
    except Exception:
        pass
    if cap <= 64 * 1024 * 1024:
        # v7x: 64 MiB per TensorCore -> leave generous headroom.
        return 44 * 1024 * 1024, 20 * 1024 * 1024
    # v5e / v6e: 128 MiB -> use it, big tiles amortize per-step overhead + halo DMA.
    return 100 * 1024 * 1024, 56 * 1024 * 1024


def _pick_row_tile(h_out, wp, cin, cout_pad, kh, kw, out_bytes, budget_bytes, max_tile):
    """Largest halo-aligned row tile that fits the VMEM budget, preferring exact
    divisors of h_out (no slack rows, no post-kernel H slice)."""
    halo = max(1, kh - 1)
    w_out = wp - (kw - 1)

    def fits(th):
        x_main = 2 * th * wp * cin * 2                 # bf16 main rows, double-buffered
        x_halo = 2 * halo * wp * cin * 2               # bf16 halo rows, double-buffered
        window = (th + halo) * wp * cin * 2            # staging scratch
        acc = th * w_out * cout_pad * 4                # f32 accumulator
        out_t = 2 * th * w_out * cout_pad * out_bytes  # output tile, double-buffered
        w_res = kh * kw * cin * cout_pad * 2 + cout_pad * 4
        return int((x_main + x_halo + window + acc + out_t + w_res) * 1.25) <= budget_bytes

    hi = max(halo, min(h_out, max_tile, 512))
    for th in range(hi, halo - 1, -1):                 # exact divisors first
        if h_out % th == 0 and th % halo == 0 and fits(th):
            return th
    for th in range(hi, halo - 1, -1):                 # fallback: accept cdiv slack
        if th % halo == 0 and fits(th):
            return th
    return halo


def conv_block_nhwc(x_nhwc, weight, bias, *, stride=1, padding=1, use_act=True,
                    row_tile=None, compute_dtype=jnp.bfloat16, out_dtype=None,
                    neg_slope=0.2, slice_output=True):
    """Fused Conv2d(KHxKW, stride 1, bias) + LeakyReLU(0.2) in NHWC layout."""
    assert stride == 1  # TODO(synk): strided ConvBlock (ESRGAN discriminator) not implemented.
    n, h, w, cin = x_nhwc.shape
    cout, cin_w, kh, kw = weight.shape
    assert cin_w == cin
    assert kh >= 2 and kw >= 2, "kernel expects a spatial kernel (KH, KW >= 2)"

    out_dtype = x_nhwc.dtype if out_dtype is None else out_dtype
    out_bytes = jnp.dtype(out_dtype).itemsize
    h_out = h + 2 * padding - (kh - 1)
    w_out = w + 2 * padding - (kw - 1)
    wp = w + 2 * padding
    halo = kh - 1
    cout_pad = ((cout + 127) // 128) * 128

    vmem_limit, tile_budget = _vmem_budgets()
    if row_tile is None:
        # Cap at h_out // 2 for batch==1 so a v7x megacore gets >= 2 parallel steps.
        max_tile = h_out if n >= 2 else max(halo, h_out // 2)
        row_tile = _pick_row_tile(h_out, wp, cin, cout_pad, kh, kw, out_bytes,
                                  tile_budget, max_tile)
    else:
        row_tile = max(halo, (int(row_tile) // halo) * halo)   # round, don't assert
    n_tiles = -(-h_out // row_tile)                            # cdiv
    h_pad_total = n_tiles * row_tile + halo
    extra_bottom = h_pad_total - (h + 2 * padding)             # 0 when row_tile | h_out

    # bf16 cast fused into the (necessary) conv zero-pad: a single XLA pad pass.
    x_pad = jnp.pad(
        x_nhwc.astype(compute_dtype),
        ((0, 0), (padding, padding + extra_bottom), (padding, padding), (0, 0)))

    # (Cout, Cin, KH, KW) -> (KH*KW, Cin, Cout_pad): one (Cin, Cout_pad) matrix per tap.
    w_taps = jnp.transpose(weight, (2, 3, 1, 0)).reshape(kh * kw, cin, cout)
    w_taps = jnp.pad(w_taps, ((0, 0), (0, 0), (0, cout_pad - cout))).astype(compute_dtype)
    b_mat = jnp.pad(bias, (0, cout_pad - cout)).reshape(1, cout_pad).astype(jnp.float32)

    kernel = functools.partial(_conv_block_kernel, kh=kh, kw=kw,
                               use_act=use_act, neg_slope=neg_slope)
    halo_stride = row_tile // halo   # halo block index step along the padded-H axis

    cost = pl.CostEstimate(
        flops=2 * n * n_tiles * row_tile * w_out * kh * kw * cin * cout_pad,
        transcendentals=0,
        bytes_accessed=int(x_pad.size * 2 + w_taps.size * 2
                           + n * n_tiles * row_tile * w_out * cout_pad * out_bytes))

    out = pl.pallas_call(
        kernel,
        out_shape=jax.ShapeDtypeStruct(
            (n, n_tiles * row_tile, w_out, cout_pad), out_dtype),
        grid=(n, n_tiles),
        in_specs=[
            # main rows of the tile
            pl.BlockSpec((1, row_tile, wp, cin), lambda b, t: (b, t, 0, 0)),
            # KH-1 halo rows just below the tile (second view of the same array)
            pl.BlockSpec((1, halo, wp, cin),
                         lambda b, t: (b, (t + 1) * halo_stride, 0, 0)),
            # per-tap weights / bias: constant blocks, stay resident in VMEM
            pl.BlockSpec((kh * kw, cin, cout_pad), lambda b, t: (0, 0, 0)),
            pl.BlockSpec((1, cout_pad), lambda b, t: (0, 0)),
        ],
        out_specs=pl.BlockSpec((1, row_tile, w_out, cout_pad),
                               lambda b, t: (b, t, 0, 0)),
        scratch_shapes=[pltpu.VMEM((row_tile + halo, wp, cin), compute_dtype)],
        compiler_params=pltpu.CompilerParams(
            dimension_semantics=("parallel", "parallel"),
            vmem_limit_bytes=vmem_limit,
        ),
        cost_estimate=cost,
    )(x_pad, x_pad, w_taps, b_mat)

    if n_tiles * row_tile != h_out:
        out = out[:, :h_out]
    if slice_output and cout_pad != cout:
        out = out[..., :cout]   # pad channels are exact zeros; keep them when chaining
    return out


def conv_block(x_nchw, weight, bias, *, stride=1, padding=1, use_act=True,
               row_tile=None):
    """PyTorch-convention wrapper (NCHW in / NCHW out).

    For chains of ConvBlocks prefer conv_block_nhwc end-to-end (out_dtype=bf16,
    slice_output=False) to avoid per-layer transpose / slice round trips through HBM.
    """
    x_nhwc = jnp.transpose(x_nchw, (0, 2, 3, 1))
    out_nhwc = conv_block_nhwc(x_nhwc, weight, bias, stride=stride,
                               padding=padding, use_act=use_act,
                               row_tile=row_tile, out_dtype=x_nchw.dtype,
                               slice_output=True)
    return jnp.transpose(out_nhwc, (0, 3, 1, 2))


def _reference(x_nchw, weight, bias, *, padding=1, use_act=True):
    out = jax.lax.conv_general_dilated(
        x_nchw, weight,
        window_strides=(1, 1),
        padding=((padding, padding), (padding, padding)),
        dimension_numbers=("NCHW", "OIHW", "NCHW"),
    )
    out = out + bias.reshape(1, -1, 1, 1)
    if use_act:
        out = jnp.where(out >= 0, out, 0.2 * out)
    return out


if __name__ == "__main__":
    key = jax.random.PRNGKey(0)
    k_x, k_w, k_b = jax.random.split(key, 3)

    # Small shapes consistent with the module's forward.
    N, Cin, Cout, H, W, KH, KW = 2, 4, 8, 16, 16, 3, 3

    x = jax.random.normal(k_x, (N, Cin, H, W), dtype=jnp.float32)
    weight = jax.random.normal(k_w, (Cout, Cin, KH, KW), dtype=jnp.float32) * 0.1
    bias = jax.random.normal(k_b, (Cout,), dtype=jnp.float32) * 0.1

    # Reference on bf16-rounded inputs (kernel feeds the MXU bf16, accumulates f32).
    x_q = x.astype(jnp.bfloat16).astype(jnp.float32)
    w_q = weight.astype(jnp.bfloat16).astype(jnp.float32)

    # use_act=True, explicit row_tile=8 exercises multi-tile halo handling.
    run_act = jax.jit(functools.partial(conv_block, use_act=True, row_tile=8))
    out = jax.block_until_ready(run_act(x, weight, bias))
    ref = _reference(x_q, w_q, bias, padding=1, use_act=True)
    assert out.shape == (N, Cout, H, W)
    assert jnp.allclose(out, ref, atol=1e-2, rtol=1e-2), "mismatch vs reference (act)"

    # use_act=False (Identity path).
    run_id = jax.jit(functools.partial(conv_block, use_act=False, row_tile=8))
    out2 = jax.block_until_ready(run_id(x, weight, bias))
    ref2 = _reference(x_q, w_q, bias, padding=1, use_act=False)
    assert jnp.allclose(out2, ref2, atol=1e-2, rtol=1e-2), "mismatch vs reference (no act)"

    # Auto row-tile path (chooser picks a divisor of H_out; single-tile case).
    run_auto = jax.jit(functools.partial(conv_block, use_act=True))
    out3 = jax.block_until_ready(run_auto(x, weight, bias))
    assert jnp.allclose(out3, ref, atol=1e-2, rtol=1e-2), "mismatch vs reference (auto tile)"

    print("KERNEL_OK")
</pallas_src>

<mosaic_0001>
module attributes {stable_mosaic.version = 11 : i64} {
  func.func @_conv_block_kernel(%arg0: i32, %arg1: i32, %arg2: memref<1x8x18x4xbf16, #tpu.memory_space<vmem>>, %arg3: memref<1x2x18x4xbf16, #tpu.memory_space<vmem>>, %arg4: memref<9x4x128xbf16, #tpu.memory_space<vmem>>, %arg5: memref<1x128xf32, #tpu.memory_space<vmem>>, %arg6: memref<1x8x16x128xf32, #tpu.memory_space<vmem>>, %arg7: memref<10x18x4xbf16, #tpu.memory_space<vmem>>) attributes {dimension_semantics = [#tpu.dimension_semantics<parallel>, #tpu.dimension_semantics<parallel>], iteration_bounds = array<i64: 2, 2>, scalar_prefetch = 0 : i64, scratch_operands = 1 : i64, tpu.core_type = #tpu.core_type<tc>, window_params = [{transform_indices = @transform_0, window_bounds = array<i64: 1, 8, 18, 4>}, {transform_indices = @transform_1, window_bounds = array<i64: 1, 2, 18, 4>}, {pipeline_mode = #tpu.pipeline_mode<synchronous>, transform_indices = @transform_2, window_bounds = array<i64: 9, 4, 128>}, {pipeline_mode = #tpu.pipeline_mode<synchronous>, transform_indices = @transform_3, window_bounds = array<i64: 1, 128>}, {transform_indices = @transform_4, window_bounds = array<i64: 1, 8, 16, 128>}]} {
    %c0 = arith.constant 0 : index
    %c0_0 = arith.constant 0 : index
    %c0_1 = arith.constant 0 : index
    %c0_2 = arith.constant 0 : index
    %0 = vector.load %arg2[%c0, %c0_0, %c0_1, %c0_2] : memref<1x8x18x4xbf16, #tpu.memory_space<vmem>>, vector<1x8x18x4xbf16>
    %1 = vector.shape_cast %0 : vector<1x8x18x4xbf16> to vector<8x18x4xbf16>
    %c0_3 = arith.constant 0 : index
    %c0_4 = arith.constant 0 : index
    %c0_5 = arith.constant 0 : index
    %2 = vector.load %arg7[%c0_3, %c0_4, %c0_5] : memref<10x18x4xbf16, #tpu.memory_space<vmem>>, vector<8x18x4xbf16>
    tpu.vector_store %arg7[%c0_3, %c0_4, %c0_5], %1 {strides = array<i32>} : memref<10x18x4xbf16, #tpu.memory_space<vmem>>, vector<8x18x4xbf16>,
    %c0_6 = arith.constant 0 : index
    %c0_7 = arith.constant 0 : index
    %c0_8 = arith.constant 0 : index
    %c0_9 = arith.constant 0 : index
    %3 = vector.load %arg3[%c0_6, %c0_7, %c0_8, %c0_9] : memref<1x2x18x4xbf16, #tpu.memory_space<vmem>>, vector<1x2x18x4xbf16>
    %4 = vector.shape_cast %3 : vector<1x2x18x4xbf16> to vector<2x18x4xbf16>
    %c8 = arith.constant 8 : index
    %c0_10 = arith.constant 0 : index
    %c0_11 = arith.constant 0 : index
    %5 = vector.load %arg7[%c8, %c0_10, %c0_11] : memref<10x18x4xbf16, #tpu.memory_space<vmem>>, vector<2x18x4xbf16>
    tpu.vector_store %arg7[%c8, %c0_10, %c0_11], %4 {strides = array<i32>} : memref<10x18x4xbf16, #tpu.memory_space<vmem>>, vector<2x18x4xbf16>,
    %cst = arith.constant 0.000000e+00 : f32
    %6 = vector.broadcast %cst : f32 to vector<128x128xf32>
    %c0_12 = arith.constant 0 : index
    %c0_13 = arith.constant 0 : index
    %c0_14 = arith.constant 0 : index
    %7 = vector.load %arg7[%c0_12, %c0_13, %c0_14] : memref<10x18x4xbf16, #tpu.memory_space<vmem>>, vector<8x16x4xbf16>
    %8 = vector.shape_cast %7 : vector<8x16x4xbf16> to vector<128x4xbf16>
    %c0_15 = arith.constant 0 : index
    %c0_16 = arith.constant 0 : index
    %c0_17 = arith.constant 0 : index
    %9 = vector.load %arg4[%c0_15, %c0_16, %c0_17] : memref<9x4x128xbf16, #tpu.memory_space<vmem>>, vector<1x4x128xbf16>
    %10 = vector.shape_cast %9 : vector<1x4x128xbf16> to vector<4x128xbf16>
    %cst_18 = arith.constant dense<0.000000e+00> : vector<128x128xf32>
    %11 = tpu.matmul %8, %10, %cst_18 {dimension_numbers = #tpu.dot_dimension_numbers<[1], [0], [0], [1], [0, 0, 1, 1], [], []>} : vector<128x4xbf16>, vector<4x128xbf16>, vector<128x128xf32> -> vector<128x128xf32>
    %12 = arith.addf %6, %11 : vector<128x128xf32>
    %c0_19 = arith.constant 0 : index
    %c1 = arith.constant 1 : index
    %c0_20 = arith.constant 0 : index
    %13 = vector.load %arg7[%c0_19, %c1, %c0_20] : memref<10x18x4xbf16, #tpu.memory_space<vmem>>, vector<8x16x4xbf16>
    %14 = vector.shape_cast %13 : vector<8x16x4xbf16> to vector<128x4xbf16>
    %c1_21 = arith.constant 1 : index
    %c0_22 = arith.constant 0 : index
    %c0_23 = arith.constant 0 : index
    %15 = vector.load %arg4[%c1_21, %c0_22, %c0_23] : memref<9x4x128xbf16, #tpu.memory_space<vmem>>, vector<1x4x128xbf16>
    %16 = vector.shape_cast %15 : vector<1x4x128xbf16> to vector<4x128xbf16>
    %cst_24 = arith.constant dense<0.000000e+00> : vector<128x128xf32>
    %17 = tpu.matmul %14, %16, %cst_24 {dimension_numbers = #tpu.dot_dimension_numbers<[1], [0], [0], [1], [0, 0, 1, 1], [], []>} : vector<128x4xbf16>, vector<4x128xbf16>, vector<128x128xf32> -> vector<128x128xf32>
    %18 = arith.addf %12, %17 : vector<128x128xf32>
    %c0_25 = arith.constant 0 : index
    %c2 = arith.constant 2 : index
    %c0_26 = arith.constant 0 : index
    %19 = vector.load %arg7[%c0_25, %c2, %c0_26] : memref<10x18x4xbf16, #tpu.memory_space<vmem>>, vector<8x16x4xbf16>
    %20 = vector.shape_cast %19 : vector<8x16x4xbf16> to vector<128x4xbf16>
    %c2_27 = arith.constant 2 : index
    %c0_28 = arith.constant 0 : index
    %c0_29 = arith.constant 0 : index
    %21 = vector.load %arg4[%c2_27, %c0_28, %c0_29] : memref<9x4x128xbf16, #tpu.memory_space<vmem>>, vector<1x4x128xbf16>
    %22 = vector.shape_cast %21 : vector<1x4x128xbf16> to vector<4x128xbf16>
    %cst_30 = arith.constant dense<0.000000e+00> : vector<128x128xf32>
    %23 = tpu.matmul %20, %22, %cst_30 {dimension_numbers = #tpu.dot_dimension_numbers<[1], [0], [0], [1], [0, 0, 1, 1], [], []>} : vector<128x4xbf16>, vector<4x128xbf16>, vector<128x128xf32> -> vector<128x128xf32>
    %24 = arith.addf %18, %23 : vector<128x128xf32>
    %c1_31 = arith.constant 1 : index
    %c0_32 = arith.constant 0 : index
    %c0_33 = arith.constant 0 : index
    %25 = vector.load %arg7[%c1_31, %c0_32, %c0_33] : memref<10x18x4xbf16, #tpu.memory_space<vmem>>, vector<8x16x4xbf16>
    %26 = vector.shape_cast %25 : vector<8x16x4xbf16> to vector<128x4xbf16>
    %c3 = arith.constant 3 : index
    %c0_34 = arith.constant 0 : index
    %c0_35 = arith.constant 0 : index
    %27 = vector.load %arg4[%c3, %c0_34, %c0_35] : memref<9x4x128xbf16, #tpu.memory_space<vmem>>, vector<1x4x128xbf16>
    %28 = vector.shape_cast %27 : vector<1x4x128xbf16> to vector<4x128xbf16>
    %cst_36 = arith.constant dense<0.000000e+00> : vector<128x128xf32>
    %29 = tpu.matmul %26, %28, %cst_36 {dimension_numbers = #tpu.dot_dimension_numbers<[1], [0], [0], [1], [0, 0, 1, 1], [], []>} : vector<128x4xbf16>, vector<4x128xbf16>, vector<128x128xf32> -> vector<128x128xf32>
    %30 = arith.addf %24, %29 : vector<128x128xf32>
    %c1_37 = arith.constant 1 : index
    %c1_38 = arith.constant 1 : index
    %c0_39 = arith.constant 0 : index
    %31 = vector.load %arg7[%c1_37, %c1_38, %c0_39] : memref<10x18x4xbf16, #tpu.memory_space<vmem>>, vector<8x16x4xbf16>
    %32 = vector.shape_cast %31 : vector<8x16x4xbf16> to vector<128x4xbf16>
    %c4 = arith.constant 4 : index
    %c0_40 = arith.constant 0 : index
    %c0_41 = arith.constant 0 : index
    %33 = vector.load %arg4[%c4, %c0_40, %c0_41] : memref<9x4x128xbf16, #tpu.memory_space<vmem>>, vector<1x4x128xbf16>
    %34 = vector.shape_cast %33 : vector<1x4x128xbf16> to vector<4x128xbf16>
    %cst_42 = arith.constant dense<0.000000e+00> : vector<128x128xf32>
    %35 = tpu.matmul %32, %34, %cst_42 {dimension_numbers = #tpu.dot_dimension_numbers<[1], [0], [0], [1], [0, 0, 1, 1], [], []>} : vector<128x4xbf16>, vector<4x128xbf16>, vector<128x128xf32> -> vector<128x128xf32>
    %36 = arith.addf %30, %35 : vector<128x128xf32>
    %c1_43 = arith.constant 1 : index
    %c2_44 = arith.constant 2 : index
    %c0_45 = arith.constant 0 : index
    %37 = vector.load %arg7[%c1_43, %c2_44, %c0_45] : memref<10x18x4xbf16, #tpu.memory_space<vmem>>, vector<8x16x4xbf16>
    %38 = vector.shape_cast %37 : vector<8x16x4xbf16> to vector<128x4xbf16>
    %c5 = arith.constant 5 : index
    %c0_46 = arith.constant 0 : index
    %c0_47 = arith.constant 0 : index
    %39 = vector.load %arg4[%c5, %c0_46, %c0_47] : memref<9x4x128xbf16, #tpu.memory_space<vmem>>, vector<1x4x128xbf16>
    %40 = vector.shape_cast %39 : vector<1x4x128xbf16> to vector<4x128xbf16>
    %cst_48 = arith.constant dense<0.000000e+00> : vector<128x128xf32>
    %41 = tpu.matmul %38, %40, %cst_48 {dimension_numbers = #tpu.dot_dimension_numbers<[1], [0], [0], [1], [0, 0, 1, 1], [], []>} : vector<128x4xbf16>, vector<4x128xbf16>, vector<128x128xf32> -> vector<128x128xf32>
    %42 = arith.addf %36, %41 : vector<128x128xf32>
    %c2_49 = arith.constant 2 : index
    %c0_50 = arith.constant 0 : index
    %c0_51 = arith.constant 0 : index
    %43 = vector.load %arg7[%c2_49, %c0_50, %c0_51] : memref<10x18x4xbf16, #tpu.memory_space<vmem>>, vector<8x16x4xbf16>
    %44 = vector.shape_cast %43 : vector<8x16x4xbf16> to vector<128x4xbf16>
    %c6 = arith.constant 6 : index
    %c0_52 = arith.constant 0 : index
    %c0_53 = arith.constant 0 : index
    %45 = vector.load %arg4[%c6, %c0_52, %c0_53] : memref<9x4x128xbf16, #tpu.memory_space<vmem>>, vector<1x4x128xbf16>
    %46 = vector.shape_cast %45 : vector<1x4x128xbf16> to vector<4x128xbf16>
    %cst_54 = arith.constant dense<0.000000e+00> : vector<128x128xf32>
    %47 = tpu.matmul %44, %46, %cst_54 {dimension_numbers = #tpu.dot_dimension_numbers<[1], [0], [0], [1], [0, 0, 1, 1], [], []>} : vector<128x4xbf16>, vector<4x128xbf16>, vector<128x128xf32> -> vector<128x128xf32>
    %48 = arith.addf %42, %47 : vector<128x128xf32>
    %c2_55 = arith.constant 2 : index
    %c1_56 = arith.constant 1 : index
    %c0_57 = arith.constant 0 : index
    %49 = vector.load %arg7[%c2_55, %c1_56, %c0_57] : memref<10x18x4xbf16, #tpu.memory_space<vmem>>, vector<8x16x4xbf16>
    %50 = vector.shape_cast %49 : vector<8x16x4xbf16> to vector<128x4xbf16>
    %c7 = arith.constant 7 : index
    %c0_58 = arith.constant 0 : index
    %c0_59 = arith.constant 0 : index
    %51 = vector.load %arg4[%c7, %c0_58, %c0_59] : memref<9x4x128xbf16, #tpu.memory_space<vmem>>, vector<1x4x128xbf16>
    %52 = vector.shape_cast %51 : vector<1x4x128xbf16> to vector<4x128xbf16>
    %cst_60 = arith.constant dense<0.000000e+00> : vector<128x128xf32>
    %53 = tpu.matmul %50, %52, %cst_60 {dimension_numbers = #tpu.dot_dimension_numbers<[1], [0], [0], [1], [0, 0, 1, 1], [], []>} : vector<128x4xbf16>, vector<4x128xbf16>, vector<128x128xf32> -> vector<128x128xf32>
    %54 = arith.addf %48, %53 : vector<128x128xf32>
    %c2_61 = arith.constant 2 : index
    %c2_62 = arith.constant 2 : index
    %c0_63 = arith.constant 0 : index
    %55 = vector.load %arg7[%c2_61, %c2_62, %c0_63] : memref<10x18x4xbf16, #tpu.memory_space<vmem>>, vector<8x16x4xbf16>
    %56 = vector.shape_cast %55 : vector<8x16x4xbf16> to vector<128x4xbf16>
    %c8_64 = arith.constant 8 : index
    %c0_65 = arith.constant 0 : index
    %c0_66 = arith.constant 0 : index
    %57 = vector.load %arg4[%c8_64, %c0_65, %c0_66] : memref<9x4x128xbf16, #tpu.memory_space<vmem>>, vector<1x4x128xbf16>
    %58 = vector.shape_cast %57 : vector<1x4x128xbf16> to vector<4x128xbf16>
    %cst_67 = arith.constant dense<0.000000e+00> : vector<128x128xf32>
    %59 = tpu.matmul %56, %58, %cst_67 {dimension_numbers = #tpu.dot_dimension_numbers<[1], [0], [0], [1], [0, 0, 1, 1], [], []>} : vector<128x4xbf16>, vector<4x128xbf16>, vector<128x128xf32> -> vector<128x128xf32>
    %60 = arith.addf %54, %59 : vector<128x128xf32>
    %c0_68 = arith.constant 0 : index
    %c0_69 = arith.constant 0 : index
    %61 = vector.load %arg5[%c0_68, %c0_69] : memref<1x128xf32, #tpu.memory_space<vmem>>, vector<1x128xf32>
    %62 = vector.broadcast %61 : vector<1x128xf32> to vector<128x128xf32>
    %63 = arith.addf %60, %62 : vector<128x128xf32>
    %cst_70 = arith.constant 2.000000e-01 : f32
    %64 = vector.broadcast %cst_70 : f32 to vector<128x128xf32>
    %65 = arith.mulf %64, %63 : vector<128x128xf32>
    %66 = arith.maximumf %63, %65 : vector<128x128xf32>
    %67 = vector.shape_cast %66 : vector<128x128xf32> to vector<1x8x16x128xf32>
    %c0_71 = arith.constant 0 : index
    %c0_72 = arith.constant 0 : index
    %c0_73 = arith.constant 0 : index
    %c0_74 = arith.constant 0 : index
    %68 = vector.load %arg6[%c0_71, %c0_72, %c0_73, %c0_74] : memref<1x8x16x128xf32, #tpu.memory_space<vmem>>, vector<1x8x16x128xf32>
    tpu.vector_store %arg6[%c0_71, %c0_72, %c0_73, %c0_74], %67 {strides = array<i32>} : memref<1x8x16x128xf32, #tpu.memory_space<vmem>>, vector<1x8x16x128xf32>,
    return
  }
  func.func @transform_0(%arg0: i32, %arg1: i32) -> (i32, i32, i32, i32) {
    %c0_i32 = arith.constant 0 : i32
    %c0_i32_0 = arith.constant 0 : i32
    %c0_i32_1 = arith.constant 0 : i32
    return %arg0, %arg1, %c0_i32, %c0_i32_0 : i32, i32, i32, i32
  }
  func.func @transform_1(%arg0: i32, %arg1: i32) -> (i32, i32, i32, i32) {
    %c1_i32 = arith.constant 1 : i32
    %0 = arith.addi %arg1, %c1_i32 : i32
    %c4_i32 = arith.constant 4 : i32
    %1 = arith.muli %0, %c4_i32 : i32
    %c0_i32 = arith.constant 0 : i32
    %c0_i32_0 = arith.constant 0 : i32
    %c0_i32_1 = arith.constant 0 : i32
    return %arg0, %1, %c0_i32, %c0_i32_0 : i32, i32, i32, i32
  }
  func.func @transform_2(%arg0: i32, %arg1: i32) -> (i32, i32, i32) {
    %c0_i32 = arith.constant 0 : i32
    %c0_i32_0 = arith.constant 0 : i32
    %c0_i32_1 = arith.constant 0 : i32
    %c0_i32_2 = arith.constant 0 : i32
    return %c0_i32, %c0_i32_0, %c0_i32_1 : i32, i32, i32
  }
  func.func @transform_3(%arg0: i32, %arg1: i32) -> (i32, i32) {
    %c0_i32 = arith.constant 0 : i32
    %c0_i32_0 = arith.constant 0 : i32
    %c0_i32_1 = arith.constant 0 : i32
    return %c0_i32, %c0_i32_0 : i32, i32
  }
  func.func @transform_4(%arg0: i32, %arg1: i32) -> (i32, i32, i32, i32) {
    %c0_i32 = arith.constant 0 : i32
    %c0_i32_0 = arith.constant 0 : i32
    %c0_i32_1 = arith.constant 0 : i32
    return %arg0, %arg1, %c0_i32, %c0_i32_0 : i32, i32, i32, i32
  }
}

</mosaic_0001>

<llo_original>
// kernel: conv_block.1
$region0: #{conv_block.1}
  #allocation0 [shape = 'u32[]', space=smem, size = 0x4, offset = 0x4, fixed_abs, tag = 'smem constant byte address 0x4 - core index']
  #allocation1 [shape = 'u32[144,128]{1,0:T(1,128)}', space=vmem, size = 0x12000, scoped, tag = 'internal scratch']
  #allocation2 [shape = 'bf16[10,18,4]{2,1,0:T(8,128)(2,1)}', space=vmem, size = 0xf000, scoped, tag = 'scratch operand']
  %s0 = inlined_call_operand.vmem [shape: bf16[2,18,18,4], index: 0, kind: input, shape index: {}, may-alias: {0,1}]
  %s1 = inlined_call_operand.vmem [shape: bf16[2,18,18,4], index: 1, kind: input, shape index: {}, may-alias: {0,1}]
  %s2 = inlined_call_operand.vmem [shape: bf16[9,4,128], index: 2, kind: input, shape index: {}]
  %s3 = inlined_call_operand.vmem [shape: f32[1,128], index: 3, kind: input, shape index: {}]
  %s4 = inlined_call_operand.vmem [shape: f32[2,16,16,128], index: 4, kind: output, shape index: {}]
  %s5 = sld [smem:[#allocation0]]
  $region49: #{conv_block.1} parent=0
    _
  %s7 = ssub.s32 1, %s5
  %s8 = scalar_select 0, %s7, %s5
  loop: start=0, step=1, limit=6
  $region2: #{conv_block.1} parent=0 // loop_pre_header
    _
  $region3: #{conv_block.1} parent=0 // loop_header
    %s10 = sphi 0, %s14
    %p11 = scmp.ge.s32.totalorder %s10, 6
    %s17 = sphi 0, %s29
    %s18 = sphi 0, %s25
    %s19 = sphi 0, %s17
    %s20 = sphi 0, %s18
    %s21 = sphi 0, %s19
    %s22 = sphi 0, %s20
    %s34 = sphi 0, %s36
    %s37 = sphi 0, %s34
    %s38 = sphi 0, %s37
    %s54 = sphi 0, %s38
    %s66 = sphi 0, %s68
    %s69 = sphi 0, %s66
    %s70 = sphi 0, %s69
    %s86 = sphi 0, %s70
    %s90 = sphi 0, %s90
    %s92 = sphi 0, %s90
    %s93 = sphi 0, %s92
    %s107 = sphi 0, %s93
    %s111 = sphi 0, %s111
    %s113 = sphi 0, %s111
    %s114 = sphi 0, %s113
    %s128 = sphi 0, %s114
    %s136 = sphi 0, %s138
    %s139 = sphi 0, %s136
    %s140 = sphi 0, %s139
    %s156 = sphi 0, %s140
  $region4: #{conv_block.1} parent=0 // loop_header_branch
    %13 = sbr.rel (%p11) target = $region8
  $region5: #{conv_block.1} parent=0 // loop_body
    %s15 = ssub.s32 %s10, 1
    %s16 = ssub.s32 %s10, 2
    %s23 = sadd.s32 1, %s18
    %p24 = scmp.ge.s32.totalorder %s23, 2
    %s25 = scalar_select %p24, 0, %s23
    %s26 = sadd.s32 1, %s17
    %s27 = scalar_select %p24, %s26, %s17
    %p28 = scmp.ge.s32.totalorder %s27, 2
    %s29 = scalar_select %p28, 0, %s27
    %s30 = ssub.s32 %s17, %s29
    %s31 = ssub.s32 %s18, %s25
    %s32 = sor.u32 %s30, %s31
    %p33 = scmp.eq.s32.totalorder %s32, 0
    %s35 = sadd.s32 %s34, 1
    %s36 = scalar_select %p33, %s34, %s35
    %p39 = pneg %p33
    %p40 = scmp.eq.s32.totalorder %s10, 3
    %p41 = por %p39, %p40
    %p42 = scmp.ne.s32.totalorder %s34, %s37
    %p43 = scmp.eq.s32.totalorder %s10, 0
    %p44 = por %p42, %p43
    %p45 = scmp.ne.s32.totalorder %s34, %s37
    %p46 = scmp.eq.s32.totalorder %s15, 3
    %p47 = por %p45, %p46
    %p48 = scmp.ne.s32.totalorder %s37, %s38
    %p49 = scmp.eq.s32.totalorder %s15, 0
    %p50 = por %p48, %p49
    %p51 = scmp.ne.s32.totalorder %s37, %s38
    %p52 = scmp.eq.s32.totalorder %s16, 3
    %p53 = por %p51, %p52
    %p55 = scmp.ne.s32.totalorder %s38, %s54
    %p56 = scmp.eq.s32.totalorder %s16, 0
    %p57 = por %p55, %p56
    %s58 = sadd.s32 %s18, 1
    %s59 = smul.u32 %s58, 4
    %s60 = sadd.s32 %s25, 1
    %s61 = smul.u32 %s60, 4
    %s62 = ssub.s32 %s17, %s29
    %s63 = ssub.s32 %s59, %s61
    %s64 = sor.u32 %s62, %s63
    %p65 = scmp.eq.s32.totalorder %s64, 0
    %s67 = sadd.s32 %s66, 1
    %s68 = scalar_select %p65, %s66, %s67
    %p71 = pneg %p65
    %p72 = scmp.eq.s32.totalorder %s10, 3
    %p73 = por %p71, %p72
    %p74 = scmp.ne.s32.totalorder %s66, %s69
    %p75 = scmp.eq.s32.totalorder %s10, 0
    %p76 = por %p74, %p75
    %p77 = scmp.ne.s32.totalorder %s66, %s69
    %p78 = scmp.eq.s32.totalorder %s15, 3
    %p79 = por %p77, %p78
    %p80 = scmp.ne.s32.totalorder %s69, %s70
    %p81 = scmp.eq.s32.totalorder %s15, 0
    %p82 = por %p80, %p81
    %p83 = scmp.ne.s32.totalorder %s69, %s70
    %p84 = scmp.eq.s32.totalorder %s16, 3
    %p85 = por %p83, %p84
    %p87 = scmp.ne.s32.totalorder %s70, %s86
    %p88 = scmp.eq.s32.totalorder %s16, 0
    %p89 = por %p87, %p88
    %s91 = sadd.s32 %s90, 1
    %p94 = scmp.eq.s32.totalorder %s10, 3
    %p95 = scmp.ne.s32.totalorder %s90, %s92
    %p96 = scmp.eq.s32.totalorder %s10, 0
    %p97 = por %p95, %p96
    %p98 = scmp.ne.s32.totalorder %s90, %s92
    %p99 = scmp.eq.s32.totalorder %s15, 3
    %p100 = por %p98, %p99
    %p101 = scmp.ne.s32.totalorder %s92, %s93
    %p102 = scmp.eq.s32.totalorder %s15, 0
    %p103 = por %p101, %p102
    %p104 = scmp.ne.s32.totalorder %s92, %s93
    %p105 = scmp.eq.s32.totalorder %s16, 3
    %p106 = por %p104, %p105
    %p108 = scmp.ne.s32.totalorder %s93, %s107
    %p109 = scmp.eq.s32.totalorder %s16, 0
    %p110 = por %p108, %p109
    %s112 = sadd.s32 %s111, 1
    %p115 = scmp.eq.s32.totalorder %s10, 3
    %p116 = scmp.ne.s32.totalorder %s111, %s113
    %p117 = scmp.eq.s32.totalorder %s10, 0
    %p118 = por %p116, %p117
    %p119 = scmp.ne.s32.totalorder %s111, %s113
    %p120 = scmp.eq.s32.totalorder %s15, 3
    %p121 = por %p119, %p120
    %p122 = scmp.ne.s32.totalorder %s113, %s114
    %p123 = scmp.eq.s32.totalorder %s15, 0
    %p124 = por %p122, %p123
    %p125 = scmp.ne.s32.totalorder %s113, %s114
    %p126 = scmp.eq.s32.totalorder %s16, 3
    %p127 = por %p125, %p126
    %p129 = scmp.ne.s32.totalorder %s114, %s128
    %p130 = scmp.eq.s32.totalorder %s16, 0
    %p131 = por %p129, %p130
    %s132 = ssub.s32 %s17, %s29
    %s133 = ssub.s32 %s18, %s25
    %s134 = sor.u32 %s132, %s133
    %p135 = scmp.eq.s32.totalorder %s134, 0
    %s137 = sadd.s32 %s136, 1
    %s138 = scalar_select %p135, %s136, %s137
    %p141 = pneg %p135
    %p142 = scmp.eq.s32.totalorder %s10, 3
    %p143 = por %p141, %p142
    %p144 = scmp.ne.s32.totalorder %s136, %s139
    %p145 = scmp.eq.s32.totalorder %s10, 0
    %p146 = por %p144, %p145
    %p147 = scmp.ne.s32.totalorder %s136, %s139
    %p148 = scmp.eq.s32.totalorder %s15, 3
    %p149 = por %p147, %p148
    %p150 = scmp.ne.s32.totalorder %s139, %s140
    %p151 = scmp.eq.s32.totalorder %s15, 0
    %p152 = por %p150, %p151
    %p153 = scmp.ne.s32.totalorder %s139, %s140
    %p154 = scmp.eq.s32.totalorder %s16, 3
    %p155 = por %p153, %p154
    %p157 = scmp.ne.s32.totalorder %s140, %s156
    %p158 = scmp.eq.s32.totalorder %s16, 0
    %p159 = por %p157, %p158
    %p160 = scmp.le.s32.totalorder 1, %s10
    %p161 = scmp.lt.s32.totalorder %s10, 5
    %p162 = pnand %p160, %p161
    %p163 = pneg %p162
    // Predicated region
    $region9: #{conv_block.1} parent=5 // pred_check
      _
    $region10: #{conv_block.1} parent=5 // pred_check_branch
      %165 = sbr.rel (%p162) target = $region12
    $region11: #{conv_block.1} parent=5 // pred_region
      %s166 = ssub.s32 %s10, 1
      // Predicated region
      $region13: #{conv_block.1} parent=11 // pred_check
        %p167 = pneg %p103
      $region14: #{conv_block.1} parent=11 // pred_check_branch
        %169 = sbr.rel (%p167) target = $region16
      $region15: #{conv_block.1} parent=11 // pred_region
        _
      $region16: #{conv_block.1} parent=11 // pred_fallthru
        _
      // Predicated region
      $region17: #{conv_block.1} parent=11 // pred_check
        %p170 = pneg %p124
      $region18: #{conv_block.1} parent=11 // pred_check_branch
        %172 = sbr.rel (%p170) target = $region20
      $region19: #{conv_block.1} parent=11 // pred_region
        _
      $region20: #{conv_block.1} parent=11 // pred_fallthru
        _
    $region12: #{conv_block.1} parent=5 // pred_fallthru
      _
    %p173 = scmp.lt.s32.totalorder %s10, 4
    // Predicated region
    $region21: #{conv_block.1} parent=5 // pred_check
      %p174 = pneg %p173
    $region22: #{conv_block.1} parent=5 // pred_check_branch
      %176 = sbr.rel (%p174) target = $region24
    $region23: #{conv_block.1} parent=5 // pred_region
      // Predicated region
      $region25: #{conv_block.1} parent=23 // pred_check
        %p177 = pneg %p44
      $region26: #{conv_block.1} parent=23 // pred_check_branch
        %179 = sbr.rel (%p177) target = $region28
      $region27: #{conv_block.1} parent=23 // pred_region
        %s180 = smul.u32 8, %s18
        %s181 = ssub.s32 18, %s180
        %p182 = scmp.lt.s32.totalorder %s181, 8
        %s183 = scalar_select %p182, %s181, 8
        %s184 = smul.u32 64, %s183
        %s185 = smul.u32 %s184, 3
        %p186 = scmp.lt.s32.totalorder %s17, 1
        %s187 = scalar_select %p186, %s17, 1
        %p188 = scmp.lt.s32.totalorder %s180, 17
        %s189 = scalar_select %p188, %s180, 17
        %s190 = smul.addr %s189, 3
        %s191 = smul.addr %s187, 54
        %s192 = sadd.s32 %s190, %s191
        %s193 = smul.addr %s192, 4
        %s194 = scalar_lea.vmem %s0, %s193
        %s195 = smul.u32 8, %s18
        %s196 = ssub.s32 18, %s195
        %p197 = scmp.lt.s32.totalorder %s196, 8
        %s198 = scalar_select %p197, %s196, 8
        %s199 = smul.u32 64, %s198
        %s200 = smul.u32 %s199, 3
      $region28: #{conv_block.1} parent=23 // pred_fallthru
        _
      // Predicated region
      $region29: #{conv_block.1} parent=23 // pred_check
        %p201 = pneg %p76
      $region30: #{conv_block.1} parent=23 // pred_check_branch
        %203 = sbr.rel (%p201) target = $region32
      $region31: #{conv_block.1} parent=23 // pred_region
        %s204 = sadd.s32 %s18, 1
        %s205 = smul.u32 %s204, 4
        %s206 = smul.u32 2, %s205
        %p207 = scmp.lt.s32.totalorder %s17, 1
        %s208 = scalar_select %p207, %s17, 1
        %p209 = scmp.lt.s32.totalorder %s206, 17
        %s210 = scalar_select %p209, %s206, 17
        %s211 = smul.addr %s210, 3
        %s212 = smul.addr %s208, 54
        %s213 = sadd.s32 %s211, %s212
        %s214 = smul.addr %s213, 4
        %s215 = scalar_lea.vmem %s1, %s214
        %s216 = sadd.s32 %s18, 1
        %s217 = smul.u32 %s216, 4
        %s218 = smul.u32 2, %s217
      $region32: #{conv_block.1} parent=23 // pred_fallthru
        _
    $region24: #{conv_block.1} parent=5 // pred_fallthru
      _
    %p219 = scmp.le.s32.totalorder 1, %s10
    %p220 = scmp.lt.s32.totalorder %s10, 5
    %p221 = pnand %p219, %p220
    %p222 = pneg %p221
    // Predicated region
    $region33: #{conv_block.1} parent=5 // pred_check
      _
    $region34: #{conv_block.1} parent=5 // pred_check_branch
      %224 = sbr.rel (%p221) target = $region36
    $region35: #{conv_block.1} parent=5 // pred_region
      %s225 = ssub.s32 %s10, 1
      %s226 = smul.u32 8, %s20
      %s227 = ssub.s32 18, %s226
      %p228 = scmp.lt.s32.totalorder %s227, 8
      %s229 = scalar_select %p228, %s227, 8
      %s230 = smul.u32 64, %s229
      %s231 = smul.u32 %s230, 3
      %p232 = scmp.lt.s32.totalorder %s19, 1
      %s233 = scalar_select %p232, %s19, 1
      %p234 = scmp.lt.s32.totalorder %s226, 17
      %s235 = scalar_select %p234, %s226, 17
      %s236 = smul.addr %s235, 3
      %s237 = smul.addr %s233, 54
      %s238 = sadd.s32 %s236, %s237
      %s239 = smul.addr %s238, 4
      %s240 = scalar_lea.vmem %s0, %s239
      %p241 = pneg %p50
      %p242 = pneg %p47
      %s243 = sadd.s32 %s20, 1
      %s244 = smul.u32 %s243, 4
      %s245 = smul.u32 2, %s244
      %p246 = scmp.lt.s32.totalorder %s19, 1
      %s247 = scalar_select %p246, %s19, 1
      %p248 = scmp.lt.s32.totalorder %s245, 17
      %s249 = scalar_select %p248, %s245, 17
      %s250 = smul.addr %s249, 3
      %s251 = smul.addr %s247, 54
      %s252 = sadd.s32 %s250, %s251
      %s253 = smul.addr %s252, 4
      %s254 = scalar_lea.vmem %s1, %s253
      %p255 = pneg %p82
      %p256 = pneg %p79
      %p257 = pneg %p103
      %p258 = pneg %p100
      %p259 = pneg %p124
      %p260 = pneg %p121
      %p261 = pneg %p152
      %p262 = pneg %p149
      %s263 = smul.u32 8, %s20
      %p264 = scmp.lt.s32.totalorder %s19, 1
      %s265 = scalar_select %p264, %s19, 1
      %p266 = scmp.lt.s32.totalorder %s263, 15
      %s267 = scalar_select %p266, %s263, 15
      %s268 = smul.addr %s267, 2
      %s269 = smul.addr %s265, 32
      %s270 = sadd.s32 %s268, %s269
      %s271 = smul.addr %s270, 8
      %s272 = scalar_lea.vmem %s4, %s271
      %s273 = smul.u32 8, %s20
      %s274 = ssub.s32 18, %s273
      %p275 = scmp.lt.s32.totalorder %s274, 8
      %s276 = scalar_select %p275, %s274, 8
      %s277 = smul.u32 64, %s276
      %s278 = smul.u32 %s277, 3
      %p279 = scmp.lt.s32.totalorder %s19, 1
      %s280 = scalar_select %p279, %s19, 1
      %p281 = scmp.lt.s32.totalorder %s273, 17
      %s282 = scalar_select %p281, %s273, 17
      %s283 = smul.addr %s282, 3
      %s284 = smul.addr %s280, 54
      %s285 = sadd.s32 %s283, %s284
      %s286 = smul.addr %s285, 4
      %s287 = scalar_lea.vmem %s0, %s286
      %s288 = smul.u32 8, %s20
      %s289 = ssub.s32 18, %s288
      %p290 = scmp.lt.s32.totalorder %s289, 8
      %s291 = scalar_select %p290, %s289, 8
      %s292 = smul.u32 64, %s291
      %s293 = smul.u32 %s292, 3
      %s294 = sadd.s32 %s20, 1
      %s295 = smul.u32 %s294, 4
      %s296 = smul.u32 2, %s295
      %p297 = scmp.lt.s32.totalorder %s19, 1
      %s298 = scalar_select %p297, %s19, 1
      %p299 = scmp.lt.s32.totalorder %s296, 17
      %s300 = scalar_select %p299, %s296, 17
      %s301 = smul.addr %s300, 3
      %s302 = smul.addr %s298, 54
      %s303 = sadd.s32 %s301, %s302
      %s304 = smul.addr %s303, 4
      %s305 = scalar_lea.vmem %s1, %s304
      %s306 = sadd.s32 %s20, 1
      %s307 = smul.u32 %s306, 4
      %s308 = smul.u32 2, %s307
      %s309 = smul.u32 8, %s20
      %p310 = scmp.lt.s32.totalorder %s19, 1
      %s311 = scalar_select %p310, %s19, 1
      %p312 = scmp.lt.s32.totalorder %s309, 15
      %s313 = scalar_select %p312, %s309, 15
      %s314 = smul.addr %s313, 2
      %s315 = smul.addr %s311, 32
      %s316 = sadd.s32 %s314, %s315
      %s317 = smul.addr %s316, 8
      %s318 = scalar_lea.vmem %s4, %s317
      %s319 = smul.u32 8, %s20
      %v321 = vld [vmem:[%s287] sm:$0xf]
      %v322 = vld [vmem:[%s287 + $0x4] sm:$0xf]
      %v323 = vld [vmem:[%s287 + $0x8] sm:$0x1]
      %v324 = vld [vmem:[%s287 + $0xc] sm:$0xf]
      %v325 = vld [vmem:[%s287 + $0x10] sm:$0xf]
      %v326 = vld [vmem:[%s287 + $0x14] sm:$0x1]
      %v327 = vld [vmem:[%s287 + $0x18] sm:$0xf]
      %v328 = vld [vmem:[%s287 + $0x1c] sm:$0xf]
      %v329 = vld [vmem:[%s287 + $0x20] sm:$0x1]
      %v330 = vld [vmem:[%s287 + $0x24] sm:$0xf]
      %v331 = vld [vmem:[%s287 + $0x28] sm:$0xf]
      %v332 = vld [vmem:[%s287 + $0x2c] sm:$0x1]
      %v333 = vld [vmem:[%s287 + $0x30] sm:$0xf]
      %v334 = vld [vmem:[%s287 + $0x34] sm:$0xf]
      %v335 = vld [vmem:[%s287 + $0x38] sm:$0x1]
      %v336 = vld [vmem:[%s287 + $0x3c] sm:$0xf]
      %v337 = vld [vmem:[%s287 + $0x40] sm:$0xf]
      %v338 = vld [vmem:[%s287 + $0x44] sm:$0x1]
      %v339 = vld [vmem:[%s287 + $0x48] sm:$0xf]
      %v340 = vld [vmem:[%s287 + $0x4c] sm:$0xf]
      %v341 = vld [vmem:[%s287 + $0x50] sm:$0x1]
      %v342 = vld [vmem:[%s287 + $0x54] sm:$0xf]
      %v343 = vld [vmem:[%s287 + $0x58] sm:$0xf]
      %v344 = vld [vmem:[%s287 + $0x5c] sm:$0x1]
      %vm345 = vcmask 27648
      %346 = vst.msk [vmem:[#allocation2] sm:$0xf] %vm345, %v321
      %347 = vst.msk [vmem:[#allocation2 + $0x4] sm:$0xf] %vm345, %v322
      %vm348 = vcmask 24576
      %349 = vst.msk [vmem:[#allocation2 + $0x8] sm:$0x1] %vm348, %v323
      %350 = vst.msk [vmem:[#allocation2 + $0xc] sm:$0xf] %vm345, %v324
      %351 = vst.msk [vmem:[#allocation2 + $0x10] sm:$0xf] %vm345, %v325
      %352 = vst.msk [vmem:[#allocation2 + $0x14] sm:$0x1] %vm348, %v326
      %353 = vst.msk [vmem:[#allocation2 + $0x18] sm:$0xf] %vm345, %v327
      %354 = vst.msk [vmem:[#allocation2 + $0x1c] sm:$0xf] %vm345, %v328
      %355 = vst.msk [vmem:[#allocation2 + $0x20] sm:$0x1] %vm348, %v329
      %356 = vst.msk [vmem:[#allocation2 + $0x24] sm:$0xf] %vm345, %v330
      %357 = vst.msk [vmem:[#allocation2 + $0x28] sm:$0xf] %vm345, %v331
      %358 = vst.msk [vmem:[#allocation2 + $0x2c] sm:$0x1] %vm348, %v332
      %359 = vst.msk [vmem:[#allocation2 + $0x30] sm:$0xf] %vm345, %v333
      %360 = vst.msk [vmem:[#allocation2 + $0x34] sm:$0xf] %vm345, %v334
      %361 = vst.msk [vmem:[#allocation2 + $0x38] sm:$0x1] %vm348, %v335
      %362 = vst.msk [vmem:[#allocation2 + $0x3c] sm:$0xf] %vm345, %v336
      %363 = vst.msk [vmem:[#allocation2 + $0x40] sm:$0xf] %vm345, %v337
      %364 = vst.msk [vmem:[#allocation2 + $0x44] sm:$0x1] %vm348, %v338
      %365 = vst.msk [vmem:[#allocation2 + $0x48] sm:$0xf] %vm345, %v339
      %366 = vst.msk [vmem:[#allocation2 + $0x4c] sm:$0xf] %vm345, %v340
      %367 = vst.msk [vmem:[#allocation2 + $0x50] sm:$0x1] %vm348, %v341
      %368 = vst.msk [vmem:[#allocation2 + $0x54] sm:$0xf] %vm345, %v342
      %369 = vst.msk [vmem:[#allocation2 + $0x58] sm:$0xf] %vm345, %v343
      %370 = vst.msk [vmem:[#allocation2 + $0x5c] sm:$0x1] %vm348, %v344
      %v371 = vld [vmem:[%s305] sm:$0xf]
      %v372 = vld [vmem:[%s305 + $0x4] sm:$0xf]
      %v373 = vld [vmem:[%s305 + $0x8] sm:$0x1]
      %v374 = vld [vmem:[%s305 + $0xc] sm:$0xf]
      %v375 = vld [vmem:[%s305 + $0x10] sm:$0xf]
      %v376 = vld [vmem:[%s305 + $0x14] sm:$0x1]
      %s377 = scalar_lea.vmem [#allocation2], 96
      %378 = vst.msk [vmem:[%s377] sm:$0xf] %vm345, %v371
      %379 = vst.msk [vmem:[%s377 + $0x4] sm:$0xf] %vm345, %v372
      %380 = vst.msk [vmem:[%s377 + $0x8] sm:$0x1] %vm348, %v373
      %381 = vst.msk [vmem:[%s377 + $0xc] sm:$0xf] %vm345, %v374
      %382 = vst.msk [vmem:[%s377 + $0x10] sm:$0xf] %vm345, %v375
      %383 = vst.msk [vmem:[%s377 + $0x14] sm:$0x1] %vm348, %v376
      %v384 = vld [vmem:[#allocation2] sm:$0xf]
      %v385 = vld [vmem:[#allocation2 + $0x4] sm:$0xf]
      %v386 = vld [vmem:[#allocation2 + $0xc] sm:$0xf]
      %v387 = vld [vmem:[#allocation2 + $0x10] sm:$0xf]
      %v388 = vld [vmem:[#allocation2 + $0x18] sm:$0xf]
      %v389 = vld [vmem:[#allocation2 + $0x1c] sm:$0xf]
      %v390 = vld [vmem:[#allocation2 + $0x24] sm:$0xf]
      %v391 = vld [vmem:[#allocation2 + $0x28] sm:$0xf]
      %v392 = vld [vmem:[#allocation2 + $0x30] sm:$0xf]
      %v393 = vld [vmem:[#allocation2 + $0x34] sm:$0xf]
      %v394 = vld [vmem:[#allocation2 + $0x3c] sm:$0xf]
      %v395 = vld [vmem:[#allocation2 + $0x40] sm:$0xf]
      %v396 = vld [vmem:[#allocation2 + $0x48] sm:$0xf]
      %v397 = vld [vmem:[#allocation2 + $0x4c] sm:$0xf]
      %v398 = vld [vmem:[#allocation2 + $0x54] sm:$0xf]
      %v399 = vld [vmem:[#allocation2 + $0x58] sm:$0xf]
      %v400 = vld [vmem:[%s2] sm:$0x3]
      %v401 = vld [vmem:[#allocation2 + $0x8] sm:$0x1]
      %v402 = vld [vmem:[#allocation2 + $0x14] sm:$0x1]
      %v403 = vld [vmem:[#allocation2 + $0x20] sm:$0x1]
      %v404 = vld [vmem:[#allocation2 + $0x2c] sm:$0x1]
      %v405 = vld [vmem:[#allocation2 + $0x38] sm:$0x1]
      %v406 = vld [vmem:[#allocation2 + $0x44] sm:$0x1]
      %v407 = vld [vmem:[#allocation2 + $0x50] sm:$0x1]
      %v408 = vld [vmem:[#allocation2 + $0x5c] sm:$0x1]
      %vm409 = vsmask.f32 3328
      %vm410 = vsmask.f32 7440
      %vm411 = vmor %vm409, %vm410
      %v413 = vshrl.u32 %v384, 16
      %v415 = vrot.slane %v413, 4
      %v416 = vshll.u32 %v384, 16
      %v418 = vrot.slane %v416, 5
      %v419 = vor.u32 %v415, %v418
      %v420 = vrot.slane %v419, 4
      %v422 = vshll.u32 %v385, 16
      %v424 = vrot.slane %v422, 5
      %v425 = vsel %vm411, %v420, %v424
      %v426 = vshrl.u32 %v385, 16
      %v428 = vrot.slane %v426, 4
      %v429 = vor.u32 %v428, %v424
      %v430 = vrot.slane %v429, 4
      %v432 = vshll.u32 %v401, 16
      %v434 = vrot.slane %v432, 5
      %v435 = vsel %vm411, %v430, %v434
      %v437 = vshrl.u32 %v386, 16
      %v439 = vrot.slane %v437, 4
      %v440 = vshll.u32 %v386, 16
      %v442 = vrot.slane %v440, 5
      %v443 = vor.u32 %v439, %v442
      %v444 = vrot.slane %v443, 4
      %v446 = vshll.u32 %v387, 16
      %v448 = vrot.slane %v446, 5
      %v449 = vsel %vm411, %v444, %v448
      %v450 = vshrl.u32 %v387, 16
      %v452 = vrot.slane %v450, 4
      %v453 = vor.u32 %v452, %v448
      %v454 = vrot.slane %v453, 4
      %v456 = vshll.u32 %v402, 16
      %v458 = vrot.slane %v456, 5
      %v459 = vsel %vm411, %v454, %v458
      %v461 = vshrl.u32 %v388, 16
      %v463 = vrot.slane %v461, 4
      %v464 = vshll.u32 %v388, 16
      %v466 = vrot.slane %v464, 5
      %v467 = vor.u32 %v463, %v466
      %v468 = vrot.slane %v467, 4
      %v470 = vshll.u32 %v389, 16
      %v472 = vrot.slane %v470, 5
      %v473 = vsel %vm411, %v468, %v472
      %v474 = vshrl.u32 %v389, 16
      %v476 = vrot.slane %v474, 4
      %v477 = vor.u32 %v476, %v472
      %v478 = vrot.slane %v477, 4
      %v480 = vshll.u32 %v403, 16
      %v482 = vrot.slane %v480, 5
      %v483 = vsel %vm411, %v478, %v482
      %v485 = vshrl.u32 %v390, 16
      %v487 = vrot.slane %v485, 4
      %v488 = vshll.u32 %v390, 16
      %v490 = vrot.slane %v488, 5
      %v491 = vor.u32 %v487, %v490
      %v492 = vrot.slane %v491, 4
      %v494 = vshll.u32 %v391, 16
      %v496 = vrot.slane %v494, 5
      %v497 = vsel %vm411, %v492, %v496
      %v498 = vshrl.u32 %v391, 16
      %v500 = vrot.slane %v498, 4
      %v501 = vor.u32 %v500, %v496
      %v502 = vrot.slane %v501, 4
      %v504 = vshll.u32 %v404, 16
      %v506 = vrot.slane %v504, 5
      %v507 = vsel %vm411, %v502, %v506
      %v509 = vshrl.u32 %v392, 16
      %v511 = vrot.slane %v509, 4
      %v512 = vshll.u32 %v392, 16
      %v514 = vrot.slane %v512, 5
      %v515 = vor.u32 %v511, %v514
      %v516 = vrot.slane %v515, 4
      %v518 = vshll.u32 %v393, 16
      %v520 = vrot.slane %v518, 5
      %v521 = vsel %vm411, %v516, %v520
      %v522 = vshrl.u32 %v393, 16
      %v524 = vrot.slane %v522, 4
      %v525 = vor.u32 %v524, %v520
      %v526 = vrot.slane %v525, 4
      %v528 = vshll.u32 %v405, 16
      %v530 = vrot.slane %v528, 5
      %v531 = vsel %vm411, %v526, %v530
      %v533 = vshrl.u32 %v394, 16
      %v535 = vrot.slane %v533, 4
      %v536 = vshll.u32 %v394, 16
      %v538 = vrot.slane %v536, 5
      %v539 = vor.u32 %v535, %v538
      %v540 = vrot.slane %v539, 4
      %v542 = vshll.u32 %v395, 16
      %v544 = vrot.slane %v542, 5
      %v545 = vsel %vm411, %v540, %v544
      %v546 = vshrl.u32 %v395, 16
      %v548 = vrot.slane %v546, 4
      %v549 = vor.u32 %v548, %v544
      %v550 = vrot.slane %v549, 4
      %v552 = vshll.u32 %v406, 16
      %v554 = vrot.slane %v552, 5
      %v555 = vsel %vm411, %v550, %v554
      %v557 = vshrl.u32 %v396, 16
      %v559 = vrot.slane %v557, 4
      %v560 = vshll.u32 %v396, 16
      %v562 = vrot.slane %v560, 5
      %v563 = vor.u32 %v559, %v562
      %v564 = vrot.slane %v563, 4
      %v566 = vshll.u32 %v397, 16
      %v568 = vrot.slane %v566, 5
      %v569 = vsel %vm411, %v564, %v568
      %v570 = vshrl.u32 %v397, 16
      %v572 = vrot.slane %v570, 4
      %v573 = vor.u32 %v572, %v568
      %v574 = vrot.slane %v573, 4
      %v576 = vshll.u32 %v407, 16
      %v578 = vrot.slane %v576, 5
      %v579 = vsel %vm411, %v574, %v578
      %v581 = vshrl.u32 %v398, 16
      %v583 = vrot.slane %v581, 4
      %v584 = vshll.u32 %v398, 16
      %v586 = vrot.slane %v584, 5
      %v587 = vor.u32 %v583, %v586
      %v588 = vrot.slane %v587, 4
      %v590 = vshll.u32 %v399, 16
      %v592 = vrot.slane %v590, 5
      %v593 = vsel %vm411, %v588, %v592
      %v594 = vshrl.u32 %v399, 16
      %v596 = vrot.slane %v594, 4
      %v597 = vor.u32 %v596, %v592
      %v598 = vrot.slane %v597, 4
      %v600 = vshll.u32 %v408, 16
      %v602 = vrot.slane %v600, 5
      %v603 = vsel %vm411, %v598, %v602
      %s604 = scalar_lea.vmem %s2, 2
      %v605 = vld [vmem:[%s604] sm:$0x3]
      %v606 = vunpack.c.l.b16 %v425
      %v607 = vunpack.c.l.b16 %v435
      %v608 = vunpack.c.l.b16 %v449
      %v609 = vunpack.c.l.b16 %v459
      %v610 = vunpack.c.l.b16 %v473
      %v611 = vunpack.c.l.b16 %v483
      %v612 = vunpack.c.l.b16 %v497
      %v613 = vunpack.c.l.b16 %v507
      %v614 = vunpack.c.l.b16 %v521
      %v615 = vunpack.c.l.b16 %v531
      %v616 = vunpack.c.l.b16 %v545
      %v617 = vunpack.c.l.b16 %v555
      %v618 = vunpack.c.l.b16 %v569
      %v619 = vunpack.c.l.b16 %v579
      %v620 = vunpack.c.l.b16 %v593
      %v621 = vunpack.c.l.b16 %v603
      %v622 = vpack.c.b16 %v607, %v606
      %v623 = vpack.c.b16 %v609, %v608
      %v624 = vpack.c.b16 %v611, %v610
      %v625 = vpack.c.b16 %v613, %v612
      %v626 = vpack.c.b16 %v615, %v614
      %v627 = vpack.c.b16 %v617, %v616
      %v628 = vpack.c.b16 %v619, %v618
      %v629 = vpack.c.b16 %v621, %v620
      %vm630 = vcmask 31744
      %v632 = vsel %vm630, %v622, 0
      %v635 = vsel %vm630, %v623, 0
      %v638 = vsel %vm630, %v624, 0
      %v641 = vsel %vm630, %v625, 0
      %v644 = vsel %vm630, %v626, 0
      %v647 = vsel %vm630, %v627, 0
      %v650 = vsel %vm630, %v628, 0
      %v653 = vsel %vm630, %v629, 0
      %vm655 = vcmask 1041408
      %v657 = vsel %vm655, %v605, 0
      %659 = vmatprep.subr.bf16.mxu0 0
      %660 = vmatpush1.bf16.msra.mxu0 %v657
      %661 = vmatprep.subr.bf16.mxu0 0
      %662 = vmatpush1.bf16.msra.mxu0 0
      %663 = vmatprep.subr.bf16.mxu0 0
      %664 = vmatpush1.bf16.msra.mxu0 0
      %665 = vmatprep.subr.bf16.mxu0 0
      %666 = vmatpush1.bf16.msra.mxu0 0
      %667 = vmatprep.subr.bf16.mxu0 0
      %668 = vmatpush1.bf16.msra.mxu0 0
      %669 = vmatprep.subr.bf16.mxu0 0
      %670 = vmatpush1.bf16.msra.mxu0 0
      %671 = vmatprep.subr.bf16.mxu0 0
      %672 = vmatpush1.bf16.msra.mxu0 0
      %673 = vmatprep.subr.bf16.mxu0 0
      %674 = vmatpush1.bf16.msra.mxu0 0
      %675 = vmatprep.subr.bf16.mxu0 0
      %676 = vmatpush1.bf16.msra.mxu0 0
      %677 = vmatprep.subr.bf16.mxu0 0
      %678 = vmatpush1.bf16.msra.mxu0 0
      %679 = vmatprep.subr.bf16.mxu0 0
      %680 = vmatpush1.bf16.msra.mxu0 0
      %681 = vmatprep.subr.bf16.mxu0 0
      %682 = vmatpush1.bf16.msra.mxu0 0
      %683 = vmatprep.subr.bf16.mxu0 0
      %684 = vmatpush1.bf16.msra.mxu0 0
      %685 = vmatprep.subr.bf16.mxu0 0
      %686 = vmatpush1.bf16.msra.mxu0 0
      %687 = vmatprep.subr.bf16.mxu0 0
      %688 = vmatpush1.bf16.msra.mxu0 0
      %689 = vmatprep.subr.bf16.mxu0 0
      %690 = vmatpush1.bf16.msra.mxu0 0
      %691 = vmatprep.mubr.bf16.mxu0 0
      %692 = vmatmul.mubr.bf16.gmra.mrb[0].mxu0 %v632
      %v693 = vpop.f32.mrb[0].mxu0
      %v694 = vadd.f32 0.0, %v693
      %v695 = vpop.f32.mrb[0].mxu0
      %v696 = vpop.f32.mrb[0].mxu0
      %v697 = vadd.f32 0.0, %v696
      %v698 = vpop.f32.mrb[0].mxu0
      %699 = vmatprep.mubr.bf16.mxu0 0
      %700 = vmatmul.mubr.bf16.gmra.mrb[0].mxu0 %v635
      %v701 = vpop.f32.mrb[0].mxu0
      %v702 = vadd.f32 0.0, %v701
      %v703 = vpop.f32.mrb[0].mxu0
      %v704 = vpop.f32.mrb[0].mxu0
      %v705 = vadd.f32 0.0, %v704
      %v706 = vpop.f32.mrb[0].mxu0
      %707 = vmatprep.mubr.bf16.mxu0 0
      %708 = vmatmul.mubr.bf16.gmra.mrb[0].mxu0 %v638
      %v709 = vpop.f32.mrb[0].mxu0
      %v710 = vadd.f32 0.0, %v709
      %v711 = vpop.f32.mrb[0].mxu0
      %v712 = vpop.f32.mrb[0].mxu0
      %v713 = vadd.f32 0.0, %v712
      %v714 = vpop.f32.mrb[0].mxu0
      %715 = vmatprep.mubr.bf16.mxu0 0
      %716 = vmatmul.mubr.bf16.gmra.mrb[0].mxu0 %v641
      %v717 = vpop.f32.mrb[0].mxu0
      %v718 = vadd.f32 0.0, %v717
      %v719 = vpop.f32.mrb[0].mxu0
      %v720 = vpop.f32.mrb[0].mxu0
      %v721 = vadd.f32 0.0, %v720
      %v722 = vpop.f32.mrb[0].mxu0
      %723 = vmatprep.mubr.bf16.mxu0 0
      %724 = vmatmul.mubr.bf16.gmra.mrb[0].mxu0 %v644
      %v725 = vpop.f32.mrb[0].mxu0
      %v726 = vadd.f32 0.0, %v725
      %v727 = vpop.f32.mrb[0].mxu0
      %v728 = vpop.f32.mrb[0].mxu0
      %v729 = vadd.f32 0.0, %v728
      %v730 = vpop.f32.mrb[0].mxu0
      %731 = vmatprep.mubr.bf16.mxu0 0
      %732 = vmatmul.mubr.bf16.gmra.mrb[0].mxu0 %v647
      %v733 = vpop.f32.mrb[0].mxu0
      %v734 = vadd.f32 0.0, %v733
      %v735 = vpop.f32.mrb[0].mxu0
      %v736 = vpop.f32.mrb[0].mxu0
      %v737 = vadd.f32 0.0, %v736
      %v738 = vpop.f32.mrb[0].mxu0
      %739 = vmatprep.mubr.bf16.mxu0 0
      %740 = vmatmul.mubr.bf16.gmra.mrb[0].mxu0 %v650
      %v741 = vpop.f32.mrb[0].mxu0
      %v742 = vadd.f32 0.0, %v741
      %v743 = vpop.f32.mrb[0].mxu0
      %v744 = vpop.f32.mrb[0].mxu0
      %v745 = vadd.f32 0.0, %v744
      %v746 = vpop.f32.mrb[0].mxu0
      %747 = vmatprep.mubr.bf16.mxu0 0
      %748 = vmatmul.mubr.bf16.gmra.mrb[0].mxu0 %v653
      %v749 = vpop.f32.mrb[0].mxu0
      %v750 = vadd.f32 0.0, %v749
      %v751 = vpop.f32.mrb[0].mxu0
      %v752 = vpop.f32.mrb[0].mxu0
      %v753 = vadd.f32 0.0, %v752
      %v754 = vpop.f32.mrb[0].mxu0
      %755 = vdwg.mxu0
      %v772 = vunpack.c.l.b16 %v384
      %v773 = vunpack.c.l.b16 %v385
      %v774 = vunpack.c.l.b16 %v386
      %v775 = vunpack.c.l.b16 %v387
      %v776 = vunpack.c.l.b16 %v388
      %v777 = vunpack.c.l.b16 %v389
      %v778 = vunpack.c.l.b16 %v390
      %v779 = vunpack.c.l.b16 %v391
      %v780 = vunpack.c.l.b16 %v392
      %v781 = vunpack.c.l.b16 %v393
      %v782 = vunpack.c.l.b16 %v394
      %v783 = vunpack.c.l.b16 %v395
      %v784 = vunpack.c.l.b16 %v396
      %v785 = vunpack.c.l.b16 %v397
      %v786 = vunpack.c.l.b16 %v398
      %v787 = vunpack.c.l.b16 %v399
      %v788 = vpack.c.b16 %v773, %v772
      %v789 = vpack.c.b16 %v775, %v774
      %v790 = vpack.c.b16 %v777, %v776
      %v791 = vpack.c.b16 %v779, %v778
      %v792 = vpack.c.b16 %v781, %v780
      %v793 = vpack.c.b16 %v783, %v782
      %v794 = vpack.c.b16 %v785, %v784
      %v795 = vpack.c.b16 %v787, %v786
      %v797 = vsel %vm630, %v788, 0
      %v800 = vsel %vm630, %v789, 0
      %v803 = vsel %vm630, %v790, 0
      %v806 = vsel %vm630, %v791, 0
      %v809 = vsel %vm630, %v792, 0
      %v812 = vsel %vm630, %v793, 0
      %v815 = vsel %vm630, %v794, 0
      %v818 = vsel %vm630, %v795, 0
      %v821 = vsel %vm655, %v400, 0
      %823 = vmatprep.subr.bf16.mxu0 0
      %824 = vmatpush1.bf16.msra.mxu0 %v821
      %825 = vmatprep.subr.bf16.mxu0 0
      %826 = vmatpush1.bf16.msra.mxu0 0
      %827 = vmatprep.subr.bf16.mxu0 0
      %828 = vmatpush1.bf16.msra.mxu0 0
      %829 = vmatprep.subr.bf16.mxu0 0
      %830 = vmatpush1.bf16.msra.mxu0 0
      %831 = vmatprep.subr.bf16.mxu0 0
      %832 = vmatpush1.bf16.msra.mxu0 0
      %833 = vmatprep.subr.bf16.mxu0 0
      %834 = vmatpush1.bf16.msra.mxu0 0
      %835 = vmatprep.subr.bf16.mxu0 0
      %836 = vmatpush1.bf16.msra.mxu0 0
      %837 = vmatprep.subr.bf16.mxu0 0
      %838 = vmatpush1.bf16.msra.mxu0 0
      %839 = vmatprep.subr.bf16.mxu0 0
      %840 = vmatpush1.bf16.msra.mxu0 0
      %841 = vmatprep.subr.bf16.mxu0 0
      %842 = vmatpush1.bf16.msra.mxu0 0
      %843 = vmatprep.subr.bf16.mxu0 0
      %844 = vmatpush1.bf16.msra.mxu0 0
      %845 = vmatprep.subr.bf16.mxu0 0
      %846 = vmatpush1.bf16.msra.mxu0 0
      %847 = vmatprep.subr.bf16.mxu0 0
      %848 = vmatpush1.bf16.msra.mxu0 0
      %849 = vmatprep.subr.bf16.mxu0 0
      %850 = vmatpush1.bf16.msra.mxu0 0
      %851 = vmatprep.subr.bf16.mxu0 0
      %852 = vmatpush1.bf16.msra.mxu0 0
      %853 = vmatprep.subr.bf16.mxu0 0
      %854 = vmatpush1.bf16.msra.mxu0 0
      %855 = vmatprep.mubr.bf16.mxu0 0
      %856 = vmatmul.mubr.bf16.gmra.mrb[0].mxu0 %v797
      %v857 = vpop.f32.mrb[0].mxu0
      %v858 = vadd.f32 %v694, %v857
      %v859 = vpop.f32.mrb[0].mxu0
      %v860 = vpop.f32.mrb[0].mxu0
      %v861 = vadd.f32 %v697, %v860
      %v862 = vpop.f32.mrb[0].mxu0
      %863 = vmatprep.mubr.bf16.mxu0 0
      %864 = vmatmul.mubr.bf16.gmra.mrb[0].mxu0 %v800
      %v865 = vpop.f32.mrb[0].mxu0
      %v866 = vadd.f32 %v702, %v865
      %v867 = vpop.f32.mrb[0].mxu0
      %v868 = vpop.f32.mrb[0].mxu0
      %v869 = vadd.f32 %v705, %v868
      %v870 = vpop.f32.mrb[0].mxu0
      %871 = vmatprep.mubr.bf16.mxu0 0
      %872 = vmatmul.mubr.bf16.gmra.mrb[0].mxu0 %v803
      %v873 = vpop.f32.mrb[0].mxu0
      %v874 = vadd.f32 %v710, %v873
      %v875 = vpop.f32.mrb[0].mxu0
      %v876 = vpop.f32.mrb[0].mxu0
      %v877 = vadd.f32 %v713, %v876
      %v878 = vpop.f32.mrb[0].mxu0
      %879 = vmatprep.mubr.bf16.mxu0 0
      %880 = vmatmul.mubr.bf16.gmra.mrb[0].mxu0 %v806
      %v881 = vpop.f32.mrb[0].mxu0
      %v882 = vadd.f32 %v718, %v881
      %v883 = vpop.f32.mrb[0].mxu0
      %v884 = vpop.f32.mrb[0].mxu0
      %v885 = vadd.f32 %v721, %v884
      %v886 = vpop.f32.mrb[0].mxu0
      %887 = vmatprep.mubr.bf16.mxu0 0
      %888 = vmatmul.mubr.bf16.gmra.mrb[0].mxu0 %v809
      %v889 = vpop.f32.mrb[0].mxu0
      %v890 = vadd.f32 %v726, %v889
      %v891 = vpop.f32.mrb[0].mxu0
      %v892 = vpop.f32.mrb[0].mxu0
      %v893 = vadd.f32 %v729, %v892
      %v894 = vpop.f32.mrb[0].mxu0
      %895 = vmatprep.mubr.bf16.mxu0 0
      %896 = vmatmul.mubr.bf16.gmra.mrb[0].mxu0 %v812
      %v897 = vpop.f32.mrb[0].mxu0
      %v898 = vadd.f32 %v734, %v897
      %v899 = vpop.f32.mrb[0].mxu0
      %v900 = vpop.f32.mrb[0].mxu0
      %v901 = vadd.f32 %v737, %v900
      %v902 = vpop.f32.mrb[0].mxu0
      %903 = vmatprep.mubr.bf16.mxu0 0
      %904 = vmatmul.mubr.bf16.gmra.mrb[0].mxu0 %v815
      %v905 = vpop.f32.mrb[0].mxu0
      %v906 = vadd.f32 %v742, %v905
      %v907 = vpop.f32.mrb[0].mxu0
      %v908 = vpop.f32.mrb[0].mxu0
      %v909 = vadd.f32 %v745, %v908
      %v910 = vpop.f32.mrb[0].mxu0
      %911 = vmatprep.mubr.bf16.mxu0 0
      %912 = vmatmul.mubr.bf16.gmra.mrb[0].mxu0 %v818
      %v913 = vpop.f32.mrb[0].mxu0
      %v914 = vadd.f32 %v750, %v913
      %v915 = vpop.f32.mrb[0].mxu0
      %v916 = vpop.f32.mrb[0].mxu0
      %v917 = vadd.f32 %v753, %v916
      %v918 = vpop.f32.mrb[0].mxu0
      %919 = vdwg.mxu0
      %v920 = vld [vmem:[#allocation2] sm:$0xe]
      %v921 = vld [vmem:[#allocation2 + $0xc] sm:$0xe]
      %v922 = vld [vmem:[#allocation2 + $0x18] sm:$0xe]
      %v923 = vld [vmem:[#allocation2 + $0x24] sm:$0xe]
      %v924 = vld [vmem:[#allocation2 + $0x30] sm:$0xe]
      %v925 = vld [vmem:[#allocation2 + $0x3c] sm:$0xe]
      %v926 = vld [vmem:[#allocation2 + $0x48] sm:$0xe]
      %v927 = vld [vmem:[#allocation2 + $0x54] sm:$0xe]
      %vm944 = vcmask 1042432
      %vm945 = vcmask 1046532
      %vm946 = vmor %vm944, %vm945
      %v947 = vrot.slane %v920, 5
      %v948 = vrot.slane %v947, 4
      %v949 = vrot.slane %v385, 5
      %v950 = vsel %vm946, %v948, %v949
      %v951 = vrot.slane %v949, 4
      %v952 = vrot.slane %v401, 5
      %v953 = vsel %vm946, %v951, %v952
      %v954 = vrot.slane %v921, 5
      %v955 = vrot.slane %v954, 4
      %v956 = vrot.slane %v387, 5
      %v957 = vsel %vm946, %v955, %v956
      %v958 = vrot.slane %v956, 4
      %v959 = vrot.slane %v402, 5
      %v960 = vsel %vm946, %v958, %v959
      %v961 = vrot.slane %v922, 5
      %v962 = vrot.slane %v961, 4
      %v963 = vrot.slane %v389, 5
      %v964 = vsel %vm946, %v962, %v963
      %v965 = vrot.slane %v963, 4
      %v966 = vrot.slane %v403, 5
      %v967 = vsel %vm946, %v965, %v966
      %v968 = vrot.slane %v923, 5
      %v969 = vrot.slane %v968, 4
      %v970 = vrot.slane %v391, 5
      %v971 = vsel %vm946, %v969, %v970
      %v972 = vrot.slane %v970, 4
      %v973 = vrot.slane %v404, 5
      %v974 = vsel %vm946, %v972, %v973
      %v975 = vrot.slane %v924, 5
      %v976 = vrot.slane %v975, 4
      %v977 = vrot.slane %v393, 5
      %v978 = vsel %vm946, %v976, %v977
      %v979 = vrot.slane %v977, 4
      %v980 = vrot.slane %v405, 5
      %v981 = vsel %vm946, %v979, %v980
      %v982 = vrot.slane %v925, 5
      %v983 = vrot.slane %v982, 4
      %v984 = vrot.slane %v395, 5
      %v985 = vsel %vm946, %v983, %v984
      %v986 = vrot.slane %v984, 4
      %v987 = vrot.slane %v406, 5
      %v988 = vsel %vm946, %v986, %v987
      %v989 = vrot.slane %v926, 5
      %v990 = vrot.slane %v989, 4
      %v991 = vrot.slane %v397, 5
      %v992 = vsel %vm946, %v990, %v991
      %v993 = vrot.slane %v991, 4
      %v994 = vrot.slane %v407, 5
      %v995 = vsel %vm946, %v993, %v994
      %v996 = vrot.slane %v927, 5
      %v997 = vrot.slane %v996, 4
      %v998 = vrot.slane %v399, 5
      %v999 = vsel %vm946, %v997, %v998
      %v1000 = vrot.slane %v998, 4
      %v1001 = vrot.slane %v408, 5
      %v1002 = vsel %vm946, %v1000, %v1001
      %s1003 = scalar_lea.vmem %s2, 4
      %v1004 = vld [vmem:[%s1003] sm:$0x3]
      %v1005 = vunpack.c.l.b16 %v950
      %v1006 = vunpack.c.l.b16 %v953
      %v1007 = vunpack.c.l.b16 %v957
      %v1008 = vunpack.c.l.b16 %v960
      %v1009 = vunpack.c.l.b16 %v964
      %v1010 = vunpack.c.l.b16 %v967
      %v1011 = vunpack.c.l.b16 %v971
      %v1012 = vunpack.c.l.b16 %v974
      %v1013 = vunpack.c.l.b16 %v978
      %v1014 = vunpack.c.l.b16 %v981
      %v1015 = vunpack.c.l.b16 %v985
      %v1016 = vunpack.c.l.b16 %v988
      %v1017 = vunpack.c.l.b16 %v992
      %v1018 = vunpack.c.l.b16 %v995
      %v1019 = vunpack.c.l.b16 %v999
      %v1020 = vunpack.c.l.b16 %v1002
      %v1021 = vpack.c.b16 %v1006, %v1005
      %v1022 = vpack.c.b16 %v1008, %v1007
      %v1023 = vpack.c.b16 %v1010, %v1009
      %v1024 = vpack.c.b16 %v1012, %v1011
      %v1025 = vpack.c.b16 %v1014, %v1013
      %v1026 = vpack.c.b16 %v1016, %v1015
      %v1027 = vpack.c.b16 %v1018, %v1017
      %v1028 = vpack.c.b16 %v1020, %v1019
      %v1030 = vsel %vm630, %v1021, 0
      %v1033 = vsel %vm630, %v1022, 0
      %v1036 = vsel %vm630, %v1023, 0
      %v1039 = vsel %vm630, %v1024, 0
      %v1042 = vsel %vm630, %v1025, 0
      %v1045 = vsel %vm630, %v1026, 0
      %v1048 = vsel %vm630, %v1027, 0
      %v1051 = vsel %vm630, %v1028, 0
      %v1054 = vsel %vm655, %v1004, 0
      %1056 = vmatprep.subr.bf16.mxu0 0
      %1057 = vmatpush1.bf16.msra.mxu0 %v1054
      %1058 = vmatprep.subr.bf16.mxu0 0
      %1059 = vmatpush1.bf16.msra.mxu0 0
      %1060 = vmatprep.subr.bf16.mxu0 0
      %1061 = vmatpush1.bf16.msra.mxu0 0
      %1062 = vmatprep.subr.bf16.mxu0 0
      %1063 = vmatpush1.bf16.msra.mxu0 0
      %1064 = vmatprep.subr.bf16.mxu0 0
      %1065 = vmatpush1.bf16.msra.mxu0 0
      %1066 = vmatprep.subr.bf16.mxu0 0
      %1067 = vmatpush1.bf16.msra.mxu0 0
      %1068 = vmatprep.subr.bf16.mxu0 0
      %1069 = vmatpush1.bf16.msra.mxu0 0
      %1070 = vmatprep.subr.bf16.mxu0 0
      %1071 = vmatpush1.bf16.msra.mxu0 0
      %1072 = vmatprep.subr.bf16.mxu0 0
      %1073 = vmatpush1.bf16.msra.mxu0 0
      %1074 = vmatprep.subr.bf16.mxu0 0
      %1075 = vmatpush1.bf16.msra.mxu0 0
      %1076 = vmatprep.subr.bf16.mxu0 0
      %1077 = vmatpush1.bf16.msra.mxu0 0
      %1078 = vmatprep.subr.bf16.mxu0 0
      %1079 = vmatpush1.bf16.msra.mxu0 0
      %1080 = vmatprep.subr.bf16.mxu0 0
      %1081 = vmatpush1.bf16.msra.mxu0 0
      %1082 = vmatprep.subr.bf16.mxu0 0
      %1083 = vmatpush1.bf16.msra.mxu0 0
      %1084 = vmatprep.subr.bf16.mxu0 0
      %1085 = vmatpush1.bf16.msra.mxu0 0
      %1086 = vmatprep.subr.bf16.mxu0 0
      %1087 = vmatpush1.bf16.msra.mxu0 0
      %1088 = vmatprep.mubr.bf16.mxu0 0
      %1089 = vmatmul.mubr.bf16.gmra.mrb[0].mxu0 %v1030
      %v1090 = vpop.f32.mrb[0].mxu0
      %v1091 = vadd.f32 0.0, %v1090
      %v1092 = vpop.f32.mrb[0].mxu0
      %v1093 = vpop.f32.mrb[0].mxu0
      %v1094 = vadd.f32 0.0, %v1093
      %v1095 = vpop.f32.mrb[0].mxu0
      %1096 = vmatprep.mubr.bf16.mxu0 0
      %1097 = vmatmul.mubr.bf16.gmra.mrb[0].mxu0 %v1033
      %v1098 = vpop.f32.mrb[0].mxu0
      %v1099 = vadd.f32 0.0, %v1098
      %v1100 = vpop.f32.mrb[0].mxu0
      %v1101 = vpop.f32.mrb[0].mxu0
      %v1102 = vadd.f32 0.0, %v1101
      %v1103 = vpop.f32.mrb[0].mxu0
      %1104 = vmatprep.mubr.bf16.mxu0 0
      %1105 = vmatmul.mubr.bf16.gmra.mrb[0].mxu0 %v1036
      %v1106 = vpop.f32.mrb[0].mxu0
      %v1107 = vadd.f32 0.0, %v1106
      %v1108 = vpop.f32.mrb[0].mxu0
      %v1109 = vpop.f32.mrb[0].mxu0
      %v1110 = vadd.f32 0.0, %v1109
      %v1111 = vpop.f32.mrb[0].mxu0
      %1112 = vmatprep.mubr.bf16.mxu0 0
      %1113 = vmatmul.mubr.bf16.gmra.mrb[0].mxu0 %v1039
      %v1114 = vpop.f32.mrb[0].mxu0
      %v1115 = vadd.f32 0.0, %v1114
      %v1116 = vpop.f32.mrb[0].mxu0
      %v1117 = vpop.f32.mrb[0].mxu0
      %v1118 = vadd.f32 0.0, %v1117
      %v1119 = vpop.f32.mrb[0].mxu0
      %1120 = vmatprep.mubr.bf16.mxu0 0
      %1121 = vmatmul.mubr.bf16.gmra.mrb[0].mxu0 %v1042
      %v1122 = vpop.f32.mrb[0].mxu0
      %v1123 = vadd.f32 0.0, %v1122
      %v1124 = vpop.f32.mrb[0].mxu0
      %v1125 = vpop.f32.mrb[0].mxu0
      %v1126 = vadd.f32 0.0, %v1125
      %v1127 = vpop.f32.mrb[0].mxu0
      %1128 = vmatprep.mubr.bf16.mxu0 0
      %1129 = vmatmul.mubr.bf16.gmra.mrb[0].mxu0 %v1045
      %v1130 = vpop.f32.mrb[0].mxu0
      %v1131 = vadd.f32 0.0, %v1130
      %v1132 = vpop.f32.mrb[0].mxu0
      %v1133 = vpop.f32.mrb[0].mxu0
      %v1134 = vadd.f32 0.0, %v1133
      %v1135 = vpop.f32.mrb[0].mxu0
      %1136 = vmatprep.mubr.bf16.mxu0 0
      %1137 = vmatmul.mubr.bf16.gmra.mrb[0].mxu0 %v1048
      %v1138 = vpop.f32.mrb[0].mxu0
      %v1139 = vadd.f32 0.0, %v1138
      %v1140 = vpop.f32.mrb[0].mxu0
      %v1141 = vpop.f32.mrb[0].mxu0
      %v1142 = vadd.f32 0.0, %v1141
      %v1143 = vpop.f32.mrb[0].mxu0
      %1144 = vmatprep.mubr.bf16.mxu0 0
      %1145 = vmatmul.mubr.bf16.gmra.mrb[0].mxu0 %v1051
      %v1146 = vpop.f32.mrb[0].mxu0
      %v1147 = vadd.f32 0.0, %v1146
      %v1148 = vpop.f32.mrb[0].mxu0
      %v1149 = vpop.f32.mrb[0].mxu0
      %v1150 = vadd.f32 0.0, %v1149
      %v1151 = vpop.f32.mrb[0].mxu0
      %1152 = vdwg.mxu0
      %v1153 = vadd.f32 %v858, %v1091
      %v1154 = vadd.f32 %v861, %v1094
      %v1155 = vadd.f32 %v866, %v1099
      %v1156 = vadd.f32 %v869, %v1102
      %v1157 = vadd.f32 %v874, %v1107
      %v1158 = vadd.f32 %v877, %v1110
      %v1159 = vadd.f32 %v882, %v1115
      %v1160 = vadd.f32 %v885, %v1118
      %v1161 = vadd.f32 %v890, %v1123
      %v1162 = vadd.f32 %v893, %v1126
      %v1163 = vadd.f32 %v898, %v1131
      %v1164 = vadd.f32 %v901, %v1134
      %v1165 = vadd.f32 %v906, %v1139
      %v1166 = vadd.f32 %v909, %v1142
      %v1167 = vadd.f32 %v914, %v1147
      %v1168 = vadd.f32 %v917, %v1150
      %s1169 = scalar_lea.vmem [#allocation2], 12
      %v1170 = vld [vmem:[%s1169] sm:$0xf]
      %v1171 = vld [vmem:[%s1169 + $0x4] sm:$0xf]
      %v1172 = vld [vmem:[%s1169 + $0xc] sm:$0xf]
      %v1173 = vld [vmem:[%s1169 + $0x10] sm:$0xf]
      %v1174 = vld [vmem:[%s1169 + $0x18] sm:$0xf]
      %v1175 = vld [vmem:[%s1169 + $0x1c] sm:$0xf]
      %v1176 = vld [vmem:[%s1169 + $0x24] sm:$0xf]
      %v1177 = vld [vmem:[%s1169 + $0x28] sm:$0xf]
      %v1178 = vld [vmem:[%s1169 + $0x30] sm:$0xf]
      %v1179 = vld [vmem:[%s1169 + $0x34] sm:$0xf]
      %v1180 = vld [vmem:[%s1169 + $0x3c] sm:$0xf]
      %v1181 = vld [vmem:[%s1169 + $0x40] sm:$0xf]
      %v1182 = vld [vmem:[%s1169 + $0x48] sm:$0xf]
      %v1183 = vld [vmem:[%s1169 + $0x4c] sm:$0xf]
      %v1184 = vld [vmem:[%s1169 + $0x54] sm:$0xf]
      %v1185 = vld [vmem:[%s1169 + $0x58] sm:$0xf]
      %s1186 = scalar_lea.vmem %s2, 6
      %v1187 = vld [vmem:[%s1186] sm:$0x3]
      %v1204 = vunpack.c.l.b16 %v1170
      %v1205 = vunpack.c.l.b16 %v1171
      %v1206 = vunpack.c.l.b16 %v1172
      %v1207 = vunpack.c.l.b16 %v1173
      %v1208 = vunpack.c.l.b16 %v1174
      %v1209 = vunpack.c.l.b16 %v1175
      %v1210 = vunpack.c.l.b16 %v1176
      %v1211 = vunpack.c.l.b16 %v1177
      %v1212 = vunpack.c.l.b16 %v1178
      %v1213 = vunpack.c.l.b16 %v1179
      %v1214 = vunpack.c.l.b16 %v1180
      %v1215 = vunpack.c.l.b16 %v1181
      %v1216 = vunpack.c.l.b16 %v1182
      %v1217 = vunpack.c.l.b16 %v1183
      %v1218 = vunpack.c.l.b16 %v1184
      %v1219 = vunpack.c.l.b16 %v1185
      %v1220 = vpack.c.b16 %v1205, %v1204
      %v1221 = vpack.c.b16 %v1207, %v1206
      %v1222 = vpack.c.b16 %v1209, %v1208
      %v1223 = vpack.c.b16 %v1211, %v1210
      %v1224 = vpack.c.b16 %v1213, %v1212
      %v1225 = vpack.c.b16 %v1215, %v1214
      %v1226 = vpack.c.b16 %v1217, %v1216
      %v1227 = vpack.c.b16 %v1219, %v1218
      %v1229 = vsel %vm630, %v1220, 0
      %v1232 = vsel %vm630, %v1221, 0
      %v1235 = vsel %vm630, %v1222, 0
      %v1238 = vsel %vm630, %v1223, 0
      %v1241 = vsel %vm630, %v1224, 0
      %v1244 = vsel %vm630, %v1225, 0
      %v1247 = vsel %vm630, %v1226, 0
      %v1250 = vsel %vm630, %v1227, 0
      %v1253 = vsel %vm655, %v1187, 0
      %1255 = vmatprep.subr.bf16.mxu0 0
      %1256 = vmatpush1.bf16.msra.mxu0 %v1253
      %1257 = vmatprep.subr.bf16.mxu0 0
      %1258 = vmatpush1.bf16.msra.mxu0 0
      %1259 = vmatprep.subr.bf16.mxu0 0
      %1260 = vmatpush1.bf16.msra.mxu0 0
      %1261 = vmatprep.subr.bf16.mxu0 0
      %1262 = vmatpush1.bf16.msra.mxu0 0
      %1263 = vmatprep.subr.bf16.mxu0 0
      %1264 = vmatpush1.bf16.msra.mxu0 0
      %1265 = vmatprep.subr.bf16.mxu0 0
      %1266 = vmatpush1.bf16.msra.mxu0 0
      %1267 = vmatprep.subr.bf16.mxu0 0
      %1268 = vmatpush1.bf16.msra.mxu0 0
      %1269 = vmatprep.subr.bf16.mxu0 0
      %1270 = vmatpush1.bf16.msra.mxu0 0
      %1271 = vmatprep.subr.bf16.mxu0 0
      %1272 = vmatpush1.bf16.msra.mxu0 0
      %1273 = vmatprep.subr.bf16.mxu0 0
      %1274 = vmatpush1.bf16.msra.mxu0 0
      %1275 = vmatprep.subr.bf16.mxu0 0
      %1276 = vmatpush1.bf16.msra.mxu0 0
      %1277 = vmatprep.subr.bf16.mxu0 0
      %1278 = vmatpush1.bf16.msra.mxu0 0
      %1279 = vmatprep.subr.bf16.mxu0 0
      %1280 = vmatpush1.bf16.msra.mxu0 0
      %1281 = vmatprep.subr.bf16.mxu0 0
      %1282 = vmatpush1.bf16.msra.mxu0 0
      %1283 = vmatprep.subr.bf16.mxu0 0
      %1284 = vmatpush1.bf16.msra.mxu0 0
      %1285 = vmatprep.subr.bf16.mxu0 0
      %1286 = vmatpush1.bf16.msra.mxu0 0
      %1287 = vmatprep.mubr.bf16.mxu0 0
      %1288 = vmatmul.mubr.bf16.gmra.mrb[0].mxu0 %v1229
      %v1289 = vpop.f32.mrb[0].mxu0
      %v1290 = vadd.f32 0.0, %v1289
      %v1291 = vpop.f32.mrb[0].mxu0
      %v1292 = vpop.f32.mrb[0].mxu0
      %v1293 = vadd.f32 0.0, %v1292
      %v1294 = vpop.f32.mrb[0].mxu0
      %1295 = vmatprep.mubr.bf16.mxu0 0
      %1296 = vmatmul.mubr.bf16.gmra.mrb[0].mxu0 %v1232
      %v1297 = vpop.f32.mrb[0].mxu0
      %v1298 = vadd.f32 0.0, %v1297
      %v1299 = vpop.f32.mrb[0].mxu0
      %v1300 = vpop.f32.mrb[0].mxu0
      %v1301 = vadd.f32 0.0, %v1300
      %v1302 = vpop.f32.mrb[0].mxu0
      %1303 = vmatprep.mubr.bf16.mxu0 0
      %1304 = vmatmul.mubr.bf16.gmra.mrb[0].mxu0 %v1235
      %v1305 = vpop.f32.mrb[0].mxu0
      %v1306 = vadd.f32 0.0, %v1305
      %v1307 = vpop.f32.mrb[0].mxu0
      %v1308 = vpop.f32.mrb[0].mxu0
      %v1309 = vadd.f32 0.0, %v1308
      %v1310 = vpop.f32.mrb[0].mxu0
      %1311 = vmatprep.mubr.bf16.mxu0 0
      %1312 = vmatmul.mubr.bf16.gmra.mrb[0].mxu0 %v1238
      %v1313 = vpop.f32.mrb[0].mxu0
      %v1314 = vadd.f32 0.0, %v1313
      %v1315 = vpop.f32.mrb[0].mxu0
      %v1316 = vpop.f32.mrb[0].mxu0
      %v1317 = vadd.f32 0.0, %v1316
      %v1318 = vpop.f32.mrb[0].mxu0
      %1319 = vmatprep.mubr.bf16.mxu0 0
      %1320 = vmatmul.mubr.bf16.gmra.mrb[0].mxu0 %v1241
      %v1321 = vpop.f32.mrb[0].mxu0
      %v1322 = vadd.f32 0.0, %v1321
      %v1323 = vpop.f32.mrb[0].mxu0
      %v1324 = vpop.f32.mrb[0].mxu0
      %v1325 = vadd.f32 0.0, %v1324
      %v1326 = vpop.f32.mrb[0].mxu0
      %1327 = vmatprep.mubr.bf16.mxu0 0
      %1328 = vmatmul.mubr.bf16.gmra.mrb[0].mxu0 %v1244
      %v1329 = vpop.f32.mrb[0].mxu0
      %v1330 = vadd.f32 0.0, %v1329
      %v1331 = vpop.f32.mrb[0].mxu0
      %v1332 = vpop.f32.mrb[0].mxu0
      %v1333 = vadd.f32 0.0, %v1332
      %v1334 = vpop.f32.mrb[0].mxu0
      %1335 = vmatprep.mubr.bf16.mxu0 0
      %1336 = vmatmul.mubr.bf16.gmra.mrb[0].mxu0 %v1247
      %v1337 = vpop.f32.mrb[0].mxu0
      %v1338 = vadd.f32 0.0, %v1337
      %v1339 = vpop.f32.mrb[0].mxu0
      %v1340 = vpop.f32.mrb[0].mxu0
      %v1341 = vadd.f32 0.0, %v1340
      %v1342 = vpop.f32.mrb[0].mxu0
      %1343 = vmatprep.mubr.bf16.mxu0 0
      %1344 = vmatmul.mubr.bf16.gmra.mrb[0].mxu0 %v1250
      %v1345 = vpop.f32.mrb[0].mxu0
      %v1346 = vadd.f32 0.0, %v1345
      %v1347 = vpop.f32.mrb[0].mxu0
      %v1348 = vpop.f32.mrb[0].mxu0
      %v1349 = vadd.f32 0.0, %v1348
      %v1350 = vpop.f32.mrb[0].mxu0
      %1351 = vdwg.mxu0
      %v1352 = vadd.f32 %v1153, %v1290
      %v1353 = vadd.f32 %v1154, %v1293
      %v1354 = vadd.f32 %v1155, %v1298
      %v1355 = vadd.f32 %v1156, %v1301
      %v1356 = vadd.f32 %v1157, %v1306
      %v1357 = vadd.f32 %v1158, %v1309
      %v1358 = vadd.f32 %v1159, %v1314
      %v1359 = vadd.f32 %v1160, %v1317
      %v1360 = vadd.f32 %v1161, %v1322
      %v1361 = vadd.f32 %v1162, %v1325
      %v1362 = vadd.f32 %v1163, %v1330
      %v1363 = vadd.f32 %v1164, %v1333
      %v1364 = vadd.f32 %v1165, %v1338
      %v1365 = vadd.f32 %v1166, %v1341
      %v1366 = vadd.f32 %v1167, %v1346
      %v1367 = vadd.f32 %v1168, %v1349
      %v1368 = vld [vmem:[%s1169] sm:$0xf]
      %v1369 = vld [vmem:[%s1169 + $0x4] sm:$0xf]
      %v1370 = vld [vmem:[%s1169 + $0x8] sm:$0x1]
      %v1371 = vld [vmem:[%s1169 + $0xc] sm:$0xf]
      %v1372 = vld [vmem:[%s1169 + $0x10] sm:$0xf]
      %v1373 = vld [vmem:[%s1169 + $0x14] sm:$0x1]
      %v1374 = vld [vmem:[%s1169 + $0x18] sm:$0xf]
      %v1375 = vld [vmem:[%s1169 + $0x1c] sm:$0xf]
      %v1376 = vld [vmem:[%s1169 + $0x20] sm:$0x1]
      %v1377 = vld [vmem:[%s1169 + $0x24] sm:$0xf]
      %v1378 = vld [vmem:[%s1169 + $0x28] sm:$0xf]
      %v1379 = vld [vmem:[%s1169 + $0x2c] sm:$0x1]
      %v1380 = vld [vmem:[%s1169 + $0x30] sm:$0xf]
      %v1381 = vld [vmem:[%s1169 + $0x34] sm:$0xf]
      %v1382 = vld [vmem:[%s1169 + $0x38] sm:$0x1]
      %v1383 = vld [vmem:[%s1169 + $0x3c] sm:$0xf]
      %v1384 = vld [vmem:[%s1169 + $0x40] sm:$0xf]
      %v1385 = vld [vmem:[%s1169 + $0x44] sm:$0x1]
      %v1386 = vld [vmem:[%s1169 + $0x48] sm:$0xf]
      %v1387 = vld [vmem:[%s1169 + $0x4c] sm:$0xf]
      %v1388 = vld [vmem:[%s1169 + $0x50] sm:$0x1]
      %v1389 = vld [vmem:[%s1169 + $0x54] sm:$0xf]
      %v1390 = vld [vmem:[%s1169 + $0x58] sm:$0xf]
      %v1391 = vld [vmem:[%s1169 + $0x5c] sm:$0x1]
      %v1393 = vshrl.u32 %v1368, 16
      %v1395 = vrot.slane %v1393, 4
      %v1396 = vshll.u32 %v1368, 16
      %v1398 = vrot.slane %v1396, 5
      %v1399 = vor.u32 %v1395, %v1398
      %v1400 = vrot.slane %v1399, 4
      %v1402 = vshll.u32 %v1369, 16
      %v1404 = vrot.slane %v1402, 5
      %v1405 = vsel %vm411, %v1400, %v1404
      %v1406 = vshrl.u32 %v1369, 16
      %v1408 = vrot.slane %v1406, 4
      %v1409 = vor.u32 %v1408, %v1404
      %v1410 = vrot.slane %v1409, 4
      %v1412 = vshll.u32 %v1370, 16
      %v1414 = vrot.slane %v1412, 5
      %v1415 = vsel %vm411, %v1410, %v1414
      %v1417 = vshrl.u32 %v1371, 16
      %v1419 = vrot.slane %v1417, 4
      %v1420 = vshll.u32 %v1371, 16
      %v1422 = vrot.slane %v1420, 5
      %v1423 = vor.u32 %v1419, %v1422
      %v1424 = vrot.slane %v1423, 4
      %v1426 = vshll.u32 %v1372, 16
      %v1428 = vrot.slane %v1426, 5
      %v1429 = vsel %vm411, %v1424, %v1428
      %v1430 = vshrl.u32 %v1372, 16
      %v1432 = vrot.slane %v1430, 4
      %v1433 = vor.u32 %v1432, %v1428
      %v1434 = vrot.slane %v1433, 4
      %v1436 = vshll.u32 %v1373, 16
      %v1438 = vrot.slane %v1436, 5
      %v1439 = vsel %vm411, %v1434, %v1438
      %v1441 = vshrl.u32 %v1374, 16
      %v1443 = vrot.slane %v1441, 4
      %v1444 = vshll.u32 %v1374, 16
      %v1446 = vrot.slane %v1444, 5
      %v1447 = vor.u32 %v1443, %v1446
      %v1448 = vrot.slane %v1447, 4
      %v1450 = vshll.u32 %v1375, 16
      %v1452 = vrot.slane %v1450, 5
      %v1453 = vsel %vm411, %v1448, %v1452
      %v1454 = vshrl.u32 %v1375, 16
      %v1456 = vrot.slane %v1454, 4
      %v1457 = vor.u32 %v1456, %v1452
      %v1458 = vrot.slane %v1457, 4
      %v1460 = vshll.u32 %v1376, 16
      %v1462 = vrot.slane %v1460, 5
      %v1463 = vsel %vm411, %v1458, %v1462
      %v1465 = vshrl.u32 %v1377, 16
      %v1467 = vrot.slane %v1465, 4
      %v1468 = vshll.u32 %v1377, 16
      %v1470 = vrot.slane %v1468, 5
      %v1471 = vor.u32 %v1467, %v1470
      %v1472 = vrot.slane %v1471, 4
      %v1474 = vshll.u32 %v1378, 16
      %v1476 = vrot.slane %v1474, 5
      %v1477 = vsel %vm411, %v1472, %v1476
      %v1478 = vshrl.u32 %v1378, 16
      %v1480 = vrot.slane %v1478, 4
      %v1481 = vor.u32 %v1480, %v1476
      %v1482 = vrot.slane %v1481, 4
      %v1484 = vshll.u32 %v1379, 16
      %v1486 = vrot.slane %v1484, 5
      %v1487 = vsel %vm411, %v1482, %v1486
      %v1489 = vshrl.u32 %v1380, 16
      %v1491 = vrot.slane %v1489, 4
      %v1492 = vshll.u32 %v1380, 16
      %v1494 = vrot.slane %v1492, 5
      %v1495 = vor.u32 %v1491, %v1494
      %v1496 = vrot.slane %v1495, 4
      %v1498 = vshll.u32 %v1381, 16
      %v1500 = vrot.slane %v1498, 5
      %v1501 = vsel %vm411, %v1496, %v1500
      %v1502 = vshrl.u32 %v1381, 16
      %v1504 = vrot.slane %v1502, 4
      %v1505 = vor.u32 %v1504, %v1500
      %v1506 = vrot.slane %v1505, 4
      %v1508 = vshll.u32 %v1382, 16
      %v1510 = vrot.slane %v1508, 5
      %v1511 = vsel %vm411, %v1506, %v1510
      %v1513 = vshrl.u32 %v1383, 16
      %v1515 = vrot.slane %v1513, 4
      %v1516 = vshll.u32 %v1383, 16
      %v1518 = vrot.slane %v1516, 5
      %v1519 = vor.u32 %v1515, %v1518
      %v1520 = vrot.slane %v1519, 4
      %v1522 = vshll.u32 %v1384, 16
      %v1524 = vrot.slane %v1522, 5
      %v1525 = vsel %vm411, %v1520, %v1524
      %v1526 = vshrl.u32 %v1384, 16
      %v1528 = vrot.slane %v1526, 4
      %v1529 = vor.u32 %v1528, %v1524
      %v1530 = vrot.slane %v1529, 4
      %v1532 = vshll.u32 %v1385, 16
      %v1534 = vrot.slane %v1532, 5
      %v1535 = vsel %vm411, %v1530, %v1534
      %v1537 = vshrl.u32 %v1386, 16
      %v1539 = vrot.slane %v1537, 4
      %v1540 = vshll.u32 %v1386, 16
      %v1542 = vrot.slane %v1540, 5
      %v1543 = vor.u32 %v1539, %v1542
      %v1544 = vrot.slane %v1543, 4
      %v1546 = vshll.u32 %v1387, 16
      %v1548 = vrot.slane %v1546, 5
      %v1549 = vsel %vm411, %v1544, %v1548
      %v1550 = vshrl.u32 %v1387, 16
      %v1552 = vrot.slane %v1550, 4
      %v1553 = vor.u32 %v1552, %v1548
      %v1554 = vrot.slane %v1553, 4
      %v1556 = vshll.u32 %v1388, 16
      %v1558 = vrot.slane %v1556, 5
      %v1559 = vsel %vm411, %v1554, %v1558
      %v1561 = vshrl.u32 %v1389, 16
      %v1563 = vrot.slane %v1561, 4
      %v1564 = vshll.u32 %v1389, 16
      %v1566 = vrot.slane %v1564, 5
      %v1567 = vor.u32 %v1563, %v1566
      %v1568 = vrot.slane %v1567, 4
      %v1570 = vshll.u32 %v1390, 16
      %v1572 = vrot.slane %v1570, 5
      %v1573 = vsel %vm411, %v1568, %v1572
      %v1574 = vshrl.u32 %v1390, 16
      %v1576 = vrot.slane %v1574, 4
      %v1577 = vor.u32 %v1576, %v1572
      %v1578 = vrot.slane %v1577, 4
      %v1580 = vshll.u32 %v1391, 16
      %v1582 = vrot.slane %v1580, 5
      %v1583 = vsel %vm411, %v1578, %v1582
      %s1584 = scalar_lea.vmem %s2, 8
      %v1585 = vld [vmem:[%s1584] sm:$0x3]
      %v1586 = vunpack.c.l.b16 %v1405
      %v1587 = vunpack.c.l.b16 %v1415
      %v1588 = vunpack.c.l.b16 %v1429
      %v1589 = vunpack.c.l.b16 %v1439
      %v1590 = vunpack.c.l.b16 %v1453
      %v1591 = vunpack.c.l.b16 %v1463
      %v1592 = vunpack.c.l.b16 %v1477
      %v1593 = vunpack.c.l.b16 %v1487
      %v1594 = vunpack.c.l.b16 %v1501
      %v1595 = vunpack.c.l.b16 %v1511
      %v1596 = vunpack.c.l.b16 %v1525
      %v1597 = vunpack.c.l.b16 %v1535
      %v1598 = vunpack.c.l.b16 %v1549
      %v1599 = vunpack.c.l.b16 %v1559
      %v1600 = vunpack.c.l.b16 %v1573
      %v1601 = vunpack.c.l.b16 %v1583
      %v1602 = vpack.c.b16 %v1587, %v1586
      %v1603 = vpack.c.b16 %v1589, %v1588
      %v1604 = vpack.c.b16 %v1591, %v1590
      %v1605 = vpack.c.b16 %v1593, %v1592
      %v1606 = vpack.c.b16 %v1595, %v1594
      %v1607 = vpack.c.b16 %v1597, %v1596
      %v1608 = vpack.c.b16 %v1599, %v1598
      %v1609 = vpack.c.b16 %v1601, %v1600
      %v1611 = vsel %vm630, %v1602, 0
      %v1614 = vsel %vm630, %v1603, 0
      %v1617 = vsel %vm630, %v1604, 0
      %v1620 = vsel %vm630, %v1605, 0
      %v1623 = vsel %vm630, %v1606, 0
      %v1626 = vsel %vm630, %v1607, 0
      %v1629 = vsel %vm630, %v1608, 0
      %v1632 = vsel %vm630, %v1609, 0
      %v1635 = vsel %vm655, %v1585, 0
      %1637 = vmatprep.subr.bf16.mxu0 0
      %1638 = vmatpush1.bf16.msra.mxu0 %v1635
      %1639 = vmatprep.subr.bf16.mxu0 0
      %1640 = vmatpush1.bf16.msra.mxu0 0
      %1641 = vmatprep.subr.bf16.mxu0 0
      %1642 = vmatpush1.bf16.msra.mxu0 0
      %1643 = vmatprep.subr.bf16.mxu0 0
      %1644 = vmatpush1.bf16.msra.mxu0 0
      %1645 = vmatprep.subr.bf16.mxu0 0
      %1646 = vmatpush1.bf16.msra.mxu0 0
      %1647 = vmatprep.subr.bf16.mxu0 0
      %1648 = vmatpush1.bf16.msra.mxu0 0
      %1649 = vmatprep.subr.bf16.mxu0 0
      %1650 = vmatpush1.bf16.msra.mxu0 0
      %1651 = vmatprep.subr.bf16.mxu0 0
      %1652 = vmatpush1.bf16.msra.mxu0 0
      %1653 = vmatprep.subr.bf16.mxu0 0
      %1654 = vmatpush1.bf16.msra.mxu0 0
      %1655 = vmatprep.subr.bf16.mxu0 0
      %1656 = vmatpush1.bf16.msra.mxu0 0
      %1657 = vmatprep.subr.bf16.mxu0 0
      %1658 = vmatpush1.bf16.msra.mxu0 0
      %1659 = vmatprep.subr.bf16.mxu0 0
      %1660 = vmatpush1.bf16.msra.mxu0 0
      %1661 = vmatprep.subr.bf16.mxu0 0
      %1662 = vmatpush1.bf16.msra.mxu0 0
      %1663 = vmatprep.subr.bf16.mxu0 0
      %1664 = vmatpush1.bf16.msra.mxu0 0
      %1665 = vmatprep.subr.bf16.mxu0 0
      %1666 = vmatpush1.bf16.msra.mxu0 0
      %1667 = vmatprep.subr.bf16.mxu0 0
      %1668 = vmatpush1.bf16.msra.mxu0 0
      %1669 = vmatprep.mubr.bf16.mxu0 0
      %1670 = vmatmul.mubr.bf16.gmra.mrb[0].mxu0 %v1611
      %v1671 = vpop.f32.mrb[0].mxu0
      %v1672 = vadd.f32 0.0, %v1671
      %v1673 = vpop.f32.mrb[0].mxu0
      %v1674 = vpop.f32.mrb[0].mxu0
      %v1675 = vadd.f32 0.0, %v1674
      %v1676 = vpop.f32.mrb[0].mxu0
      %1677 = vmatprep.mubr.bf16.mxu0 0
      %1678 = vmatmul.mubr.bf16.gmra.mrb[0].mxu0 %v1614
      %v1679 = vpop.f32.mrb[0].mxu0
      %v1680 = vadd.f32 0.0, %v1679
      %v1681 = vpop.f32.mrb[0].mxu0
      %v1682 = vpop.f32.mrb[0].mxu0
      %v1683 = vadd.f32 0.0, %v1682
      %v1684 = vpop.f32.mrb[0].mxu0
      %1685 = vmatprep.mubr.bf16.mxu0 0
      %1686 = vmatmul.mubr.bf16.gmra.mrb[0].mxu0 %v1617
      %v1687 = vpop.f32.mrb[0].mxu0
      %v1688 = vadd.f32 0.0, %v1687
      %v1689 = vpop.f32.mrb[0].mxu0
      %v1690 = vpop.f32.mrb[0].mxu0
      %v1691 = vadd.f32 0.0, %v1690
      %v1692 = vpop.f32.mrb[0].mxu0
      %1693 = vmatprep.mubr.bf16.mxu0 0
      %1694 = vmatmul.mubr.bf16.gmra.mrb[0].mxu0 %v1620
      %v1695 = vpop.f32.mrb[0].mxu0
      %v1696 = vadd.f32 0.0, %v1695
      %v1697 = vpop.f32.mrb[0].mxu0
      %v1698 = vpop.f32.mrb[0].mxu0
      %v1699 = vadd.f32 0.0, %v1698
      %v1700 = vpop.f32.mrb[0].mxu0
      %1701 = vmatprep.mubr.bf16.mxu0 0
      %1702 = vmatmul.mubr.bf16.gmra.mrb[0].mxu0 %v1623
      %v1703 = vpop.f32.mrb[0].mxu0
      %v1704 = vadd.f32 0.0, %v1703
      %v1705 = vpop.f32.mrb[0].mxu0
      %v1706 = vpop.f32.mrb[0].mxu0
      %v1707 = vadd.f32 0.0, %v1706
      %v1708 = vpop.f32.mrb[0].mxu0
      %1709 = vmatprep.mubr.bf16.mxu0 0
      %1710 = vmatmul.mubr.bf16.gmra.mrb[0].mxu0 %v1626
      %v1711 = vpop.f32.mrb[0].mxu0
      %v1712 = vadd.f32 0.0, %v1711
      %v1713 = vpop.f32.mrb[0].mxu0
      %v1714 = vpop.f32.mrb[0].mxu0
      %v1715 = vadd.f32 0.0, %v1714
      %v1716 = vpop.f32.mrb[0].mxu0
      %1717 = vmatprep.mubr.bf16.mxu0 0
      %1718 = vmatmul.mubr.bf16.gmra.mrb[0].mxu0 %v1629
      %v1719 = vpop.f32.mrb[0].mxu0
      %v1720 = vadd.f32 0.0, %v1719
      %v1721 = vpop.f32.mrb[0].mxu0
      %v1722 = vpop.f32.mrb[0].mxu0
      %v1723 = vadd.f32 0.0, %v1722
      %v1724 = vpop.f32.mrb[0].mxu0
      %1725 = vmatprep.mubr.bf16.mxu0 0
      %1726 = vmatmul.mubr.bf16.gmra.mrb[0].mxu0 %v1632
      %v1727 = vpop.f32.mrb[0].mxu0
      %v1728 = vadd.f32 0.0, %v1727
      %v1729 = vpop.f32.mrb[0].mxu0
      %v1730 = vpop.f32.mrb[0].mxu0
      %v1731 = vadd.f32 0.0, %v1730
      %v1732 = vpop.f32.mrb[0].mxu0
      %1733 = vdwg.mxu0
      %v1734 = vadd.f32 %v1352, %v1672
      %v1735 = vadd.f32 %v1353, %v1675
      %v1736 = vadd.f32 %v1354, %v1680
      %v1737 = vadd.f32 %v1355, %v1683
      %v1738 = vadd.f32 %v1356, %v1688
      %v1739 = vadd.f32 %v1357, %v1691
      %v1740 = vadd.f32 %v1358, %v1696
      %v1741 = vadd.f32 %v1359, %v1699
      %v1742 = vadd.f32 %v1360, %v1704
      %v1743 = vadd.f32 %v1361, %v1707
      %v1744 = vadd.f32 %v1362, %v1712
      %v1745 = vadd.f32 %v1363, %v1715
      %v1746 = vadd.f32 %v1364, %v1720
      %v1747 = vadd.f32 %v1365, %v1723
      %v1748 = vadd.f32 %v1366, %v1728
      %v1749 = vadd.f32 %v1367, %v1731
      %v1750 = vld [vmem:[%s1169] sm:$0xe]
      %v1751 = vld [vmem:[%s1169 + $0xc] sm:$0xe]
      %v1752 = vld [vmem:[%s1169 + $0x18] sm:$0xe]
      %v1753 = vld [vmem:[%s1169 + $0x24] sm:$0xe]
      %v1754 = vld [vmem:[%s1169 + $0x30] sm:$0xe]
      %v1755 = vld [vmem:[%s1169 + $0x3c] sm:$0xe]
      %v1756 = vld [vmem:[%s1169 + $0x48] sm:$0xe]
      %v1757 = vld [vmem:[%s1169 + $0x54] sm:$0xe]
      %v1782 = vrot.slane %v1750, 5
      %v1783 = vrot.slane %v1782, 4
      %v1784 = vrot.slane %v1369, 5
      %v1785 = vsel %vm946, %v1783, %v1784
      %v1786 = vrot.slane %v1784, 4
      %v1787 = vrot.slane %v1370, 5
      %v1788 = vsel %vm946, %v1786, %v1787
      %v1789 = vrot.slane %v1751, 5
      %v1790 = vrot.slane %v1789, 4
      %v1791 = vrot.slane %v1372, 5
      %v1792 = vsel %vm946, %v1790, %v1791
      %v1793 = vrot.slane %v1791, 4
      %v1794 = vrot.slane %v1373, 5
      %v1795 = vsel %vm946, %v1793, %v1794
      %v1796 = vrot.slane %v1752, 5
      %v1797 = vrot.slane %v1796, 4
      %v1798 = vrot.slane %v1375, 5
      %v1799 = vsel %vm946, %v1797, %v1798
      %v1800 = vrot.slane %v1798, 4
      %v1801 = vrot.slane %v1376, 5
      %v1802 = vsel %vm946, %v1800, %v1801
      %v1803 = vrot.slane %v1753, 5
      %v1804 = vrot.slane %v1803, 4
      %v1805 = vrot.slane %v1378, 5
      %v1806 = vsel %vm946, %v1804, %v1805
      %v1807 = vrot.slane %v1805, 4
      %v1808 = vrot.slane %v1379, 5
      %v1809 = vsel %vm946, %v1807, %v1808
      %v1810 = vrot.slane %v1754, 5
      %v1811 = vrot.slane %v1810, 4
      %v1812 = vrot.slane %v1381, 5
      %v1813 = vsel %vm946, %v1811, %v1812
      %v1814 = vrot.slane %v1812, 4
      %v1815 = vrot.slane %v1382, 5
      %v1816 = vsel %vm946, %v1814, %v1815
      %v1817 = vrot.slane %v1755, 5
      %v1818 = vrot.slane %v1817, 4
      %v1819 = vrot.slane %v1384, 5
      %v1820 = vsel %vm946, %v1818, %v1819
      %v1821 = vrot.slane %v1819, 4
      %v1822 = vrot.slane %v1385, 5
      %v1823 = vsel %vm946, %v1821, %v1822
      %v1824 = vrot.slane %v1756, 5
      %v1825 = vrot.slane %v1824, 4
      %v1826 = vrot.slane %v1387, 5
      %v1827 = vsel %vm946, %v1825, %v1826
      %v1828 = vrot.slane %v1826, 4
      %v1829 = vrot.slane %v1388, 5
      %v1830 = vsel %vm946, %v1828, %v1829
      %v1831 = vrot.slane %v1757, 5
      %v1832 = vrot.slane %v1831, 4
      %v1833 = vrot.slane %v1390, 5
      %v1834 = vsel %vm946, %v1832, %v1833
      %v1835 = vrot.slane %v1833, 4
      %v1836 = vrot.slane %v1391, 5
      %v1837 = vsel %vm946, %v1835, %v1836
      %s1838 = scalar_lea.vmem %s2, 10
      %v1839 = vld [vmem:[%s1838] sm:$0x3]
      %v1840 = vunpack.c.l.b16 %v1785
      %v1841 = vunpack.c.l.b16 %v1788
      %v1842 = vunpack.c.l.b16 %v1792
      %v1843 = vunpack.c.l.b16 %v1795
      %v1844 = vunpack.c.l.b16 %v1799
      %v1845 = vunpack.c.l.b16 %v1802
      %v1846 = vunpack.c.l.b16 %v1806
      %v1847 = vunpack.c.l.b16 %v1809
      %v1848 = vunpack.c.l.b16 %v1813
      %v1849 = vunpack.c.l.b16 %v1816
      %v1850 = vunpack.c.l.b16 %v1820
      %v1851 = vunpack.c.l.b16 %v1823
      %v1852 = vunpack.c.l.b16 %v1827
      %v1853 = vunpack.c.l.b16 %v1830
      %v1854 = vunpack.c.l.b16 %v1834
      %v1855 = vunpack.c.l.b16 %v1837
      %v1856 = vpack.c.b16 %v1841, %v1840
      %v1857 = vpack.c.b16 %v1843, %v1842
      %v1858 = vpack.c.b16 %v1845, %v1844
      %v1859 = vpack.c.b16 %v1847, %v1846
      %v1860 = vpack.c.b16 %v1849, %v1848
      %v1861 = vpack.c.b16 %v1851, %v1850
      %v1862 = vpack.c.b16 %v1853, %v1852
      %v1863 = vpack.c.b16 %v1855, %v1854
      %v1865 = vsel %vm630, %v1856, 0
      %v1868 = vsel %vm630, %v1857, 0
      %v1871 = vsel %vm630, %v1858, 0
      %v1874 = vsel %vm630, %v1859, 0
      %v1877 = vsel %vm630, %v1860, 0
      %v1880 = vsel %vm630, %v1861, 0
      %v1883 = vsel %vm630, %v1862, 0
      %v1886 = vsel %vm630, %v1863, 0
      %v1889 = vsel %vm655, %v1839, 0
      %1891 = vmatprep.subr.bf16.mxu0 0
      %1892 = vmatpush1.bf16.msra.mxu0 %v1889
      %1893 = vmatprep.subr.bf16.mxu0 0
      %1894 = vmatpush1.bf16.msra.mxu0 0
      %1895 = vmatprep.subr.bf16.mxu0 0
      %1896 = vmatpush1.bf16.msra.mxu0 0
      %1897 = vmatprep.subr.bf16.mxu0 0
      %1898 = vmatpush1.bf16.msra.mxu0 0
      %1899 = vmatprep.subr.bf16.mxu0 0
      %1900 = vmatpush1.bf16.msra.mxu0 0
      %1901 = vmatprep.subr.bf16.mxu0 0
      %1902 = vmatpush1.bf16.msra.mxu0 0
      %1903 = vmatprep.subr.bf16.mxu0 0
      %1904 = vmatpush1.bf16.msra.mxu0 0
      %1905 = vmatprep.subr.bf16.mxu0 0
      %1906 = vmatpush1.bf16.msra.mxu0 0
      %1907 = vmatprep.subr.bf16.mxu0 0
      %1908 = vmatpush1.bf16.msra.mxu0 0
      %1909 = vmatprep.subr.bf16.mxu0 0
      %1910 = vmatpush1.bf16.msra.mxu0 0
      %1911 = vmatprep.subr.bf16.mxu0 0
      %1912 = vmatpush1.bf16.msra.mxu0 0
      %1913 = vmatprep.subr.bf16.mxu0 0
      %1914 = vmatpush1.bf16.msra.mxu0 0
      %1915 = vmatprep.subr.bf16.mxu0 0
      %1916 = vmatpush1.bf16.msra.mxu0 0
      %1917 = vmatprep.subr.bf16.mxu0 0
      %1918 = vmatpush1.bf16.msra.mxu0 0
      %1919 = vmatprep.subr.bf16.mxu0 0
      %1920 = vmatpush1.bf16.msra.mxu0 0
      %1921 = vmatprep.subr.bf16.mxu0 0
      %1922 = vmatpush1.bf16.msra.mxu0 0
      %1923 = vmatprep.mubr.bf16.mxu0 0
      %1924 = vmatmul.mubr.bf16.gmra.mrb[0].mxu0 %v1865
      %v1925 = vpop.f32.mrb[0].mxu0
      %v1926 = vadd.f32 0.0, %v1925
      %v1927 = vpop.f32.mrb[0].mxu0
      %v1928 = vpop.f32.mrb[0].mxu0
      %v1929 = vadd.f32 0.0, %v1928
      %v1930 = vpop.f32.mrb[0].mxu0
      %1931 = vmatprep.mubr.bf16.mxu0 0
      %1932 = vmatmul.mubr.bf16.gmra.mrb[0].mxu0 %v1868
      %v1933 = vpop.f32.mrb[0].mxu0
      %v1934 = vadd.f32 0.0, %v1933
      %v1935 = vpop.f32.mrb[0].mxu0
      %v1936 = vpop.f32.mrb[0].mxu0
      %v1937 = vadd.f32 0.0, %v1936
      %v1938 = vpop.f32.mrb[0].mxu0
      %1939 = vmatprep.mubr.bf16.mxu0 0
      %1940 = vmatmul.mubr.bf16.gmra.mrb[0].mxu0 %v1871
      %v1941 = vpop.f32.mrb[0].mxu0
      %v1942 = vadd.f32 0.0, %v1941
      %v1943 = vpop.f32.mrb[0].mxu0
      %v1944 = vpop.f32.mrb[0].mxu0
      %v1945 = vadd.f32 0.0, %v1944
      %v1946 = vpop.f32.mrb[0].mxu0
      %1947 = vmatprep.mubr.bf16.mxu0 0
      %1948 = vmatmul.mubr.bf16.gmra.mrb[0].mxu0 %v1874
      %v1949 = vpop.f32.mrb[0].mxu0
      %v1950 = vadd.f32 0.0, %v1949
      %v1951 = vpop.f32.mrb[0].mxu0
      %v1952 = vpop.f32.mrb[0].mxu0
      %v1953 = vadd.f32 0.0, %v1952
      %v1954 = vpop.f32.mrb[0].mxu0
      %1955 = vmatprep.mubr.bf16.mxu0 0
      %1956 = vmatmul.mubr.bf16.gmra.mrb[0].mxu0 %v1877
      %v1957 = vpop.f32.mrb[0].mxu0
      %v1958 = vadd.f32 0.0, %v1957
      %v1959 = vpop.f32.mrb[0].mxu0
      %v1960 = vpop.f32.mrb[0].mxu0
      %v1961 = vadd.f32 0.0, %v1960
      %v1962 = vpop.f32.mrb[0].mxu0
      %1963 = vmatprep.mubr.bf16.mxu0 0
      %1964 = vmatmul.mubr.bf16.gmra.mrb[0].mxu0 %v1880
      %v1965 = vpop.f32.mrb[0].mxu0
      %v1966 = vadd.f32 0.0, %v1965
      %v1967 = vpop.f32.mrb[0].mxu0
      %v1968 = vpop.f32.mrb[0].mxu0
      %v1969 = vadd.f32 0.0, %v1968
      %v1970 = vpop.f32.mrb[0].mxu0
      %1971 = vmatprep.mubr.bf16.mxu0 0
      %1972 = vmatmul.mubr.bf16.gmra.mrb[0].mxu0 %v1883
      %v1973 = vpop.f32.mrb[0].mxu0
      %v1974 = vadd.f32 0.0, %v1973
      %v1975 = vpop.f32.mrb[0].mxu0
      %v1976 = vpop.f32.mrb[0].mxu0
      %v1977 = vadd.f32 0.0, %v1976
      %v1978 = vpop.f32.mrb[0].mxu0
      %1979 = vmatprep.mubr.bf16.mxu0 0
      %1980 = vmatmul.mubr.bf16.gmra.mrb[0].mxu0 %v1886
      %v1981 = vpop.f32.mrb[0].mxu0
      %v1982 = vadd.f32 0.0, %v1981
      %v1983 = vpop.f32.mrb[0].mxu0
      %v1984 = vpop.f32.mrb[0].mxu0
      %v1985 = vadd.f32 0.0, %v1984
      %v1986 = vpop.f32.mrb[0].mxu0
      %1987 = vdwg.mxu0
      %v1988 = vadd.f32 %v1734, %v1926
      %v1989 = vadd.f32 %v1735, %v1929
      %v1990 = vadd.f32 %v1736, %v1934
      %v1991 = vadd.f32 %v1737, %v1937
      %v1992 = vadd.f32 %v1738, %v1942
      %v1993 = vadd.f32 %v1739, %v1945
      %v1994 = vadd.f32 %v1740, %v1950
      %v1995 = vadd.f32 %v1741, %v1953
      %v1996 = vadd.f32 %v1742, %v1958
      %v1997 = vadd.f32 %v1743, %v1961
      %v1998 = vadd.f32 %v1744, %v1966
      %v1999 = vadd.f32 %v1745, %v1969
      %v2000 = vadd.f32 %v1746, %v1974
      %v2001 = vadd.f32 %v1747, %v1977
      %v2002 = vadd.f32 %v1748, %v1982
      %v2003 = vadd.f32 %v1749, %v1985
      %s2004 = scalar_lea.vmem [#allocation2], 24
      %v2005 = vld [vmem:[%s2004] sm:$0xf]
      %v2006 = vld [vmem:[%s2004 + $0x4] sm:$0xf]
      %v2007 = vld [vmem:[%s2004 + $0xc] sm:$0xf]
      %v2008 = vld [vmem:[%s2004 + $0x10] sm:$0xf]
      %v2009 = vld [vmem:[%s2004 + $0x18] sm:$0xf]
      %v2010 = vld [vmem:[%s2004 + $0x1c] sm:$0xf]
      %v2011 = vld [vmem:[%s2004 + $0x24] sm:$0xf]
      %v2012 = vld [vmem:[%s2004 + $0x28] sm:$0xf]
      %v2013 = vld [vmem:[%s2004 + $0x30] sm:$0xf]
      %v2014 = vld [vmem:[%s2004 + $0x34] sm:$0xf]
      %v2015 = vld [vmem:[%s2004 + $0x3c] sm:$0xf]
      %v2016 = vld [vmem:[%s2004 + $0x40] sm:$0xf]
      %v2017 = vld [vmem:[%s2004 + $0x48] sm:$0xf]
      %v2018 = vld [vmem:[%s2004 + $0x4c] sm:$0xf]
      %v2019 = vld [vmem:[%s2004 + $0x54] sm:$0xf]
      %v2020 = vld [vmem:[%s2004 + $0x58] sm:$0xf]
      %s2021 = scalar_lea.vmem %s2, 12
      %v2022 = vld [vmem:[%s2021] sm:$0x3]
      %v2039 = vunpack.c.l.b16 %v2005
      %v2040 = vunpack.c.l.b16 %v2006
      %v2041 = vunpack.c.l.b16 %v2007
      %v2042 = vunpack.c.l.b16 %v2008
      %v2043 = vunpack.c.l.b16 %v2009
      %v2044 = vunpack.c.l.b16 %v2010
      %v2045 = vunpack.c.l.b16 %v2011
      %v2046 = vunpack.c.l.b16 %v2012
      %v2047 = vunpack.c.l.b16 %v2013
      %v2048 = vunpack.c.l.b16 %v2014
      %v2049 = vunpack.c.l.b16 %v2015
      %v2050 = vunpack.c.l.b16 %v2016
      %v2051 = vunpack.c.l.b16 %v2017
      %v2052 = vunpack.c.l.b16 %v2018
      %v2053 = vunpack.c.l.b16 %v2019
      %v2054 = vunpack.c.l.b16 %v2020
      %v2055 = vpack.c.b16 %v2040, %v2039
      %v2056 = vpack.c.b16 %v2042, %v2041
      %v2057 = vpack.c.b16 %v2044, %v2043
      %v2058 = vpack.c.b16 %v2046, %v2045
      %v2059 = vpack.c.b16 %v2048, %v2047
      %v2060 = vpack.c.b16 %v2050, %v2049
      %v2061 = vpack.c.b16 %v2052, %v2051
      %v2062 = vpack.c.b16 %v2054, %v2053
      %v2064 = vsel %vm630, %v2055, 0
      %v2067 = vsel %vm630, %v2056, 0
      %v2070 = vsel %vm630, %v2057, 0
      %v2073 = vsel %vm630, %v2058, 0
      %v2076 = vsel %vm630, %v2059, 0
      %v2079 = vsel %vm630, %v2060, 0
      %v2082 = vsel %vm630, %v2061, 0
      %v2085 = vsel %vm630, %v2062, 0
      %v2088 = vsel %vm655, %v2022, 0
      %2090 = vmatprep.subr.bf16.mxu0 0
      %2091 = vmatpush1.bf16.msra.mxu0 %v2088
      %2092 = vmatprep.subr.bf16.mxu0 0
      %2093 = vmatpush1.bf16.msra.mxu0 0
      %2094 = vmatprep.subr.bf16.mxu0 0
      %2095 = vmatpush1.bf16.msra.mxu0 0
      %2096 = vmatprep.subr.bf16.mxu0 0
      %2097 = vmatpush1.bf16.msra.mxu0 0
      %2098 = vmatprep.subr.bf16.mxu0 0
      %2099 = vmatpush1.bf16.msra.mxu0 0
      %2100 = vmatprep.subr.bf16.mxu0 0
      %2101 = vmatpush1.bf16.msra.mxu0 0
      %2102 = vmatprep.subr.bf16.mxu0 0
      %2103 = vmatpush1.bf16.msra.mxu0 0
      %2104 = vmatprep.subr.bf16.mxu0 0
      %2105 = vmatpush1.bf16.msra.mxu0 0
      %2106 = vmatprep.subr.bf16.mxu0 0
      %2107 = vmatpush1.bf16.msra.mxu0 0
      %2108 = vmatprep.subr.bf16.mxu0 0
      %2109 = vmatpush1.bf16.msra.mxu0 0
      %2110 = vmatprep.subr.bf16.mxu0 0
      %2111 = vmatpush1.bf16.msra.mxu0 0
      %2112 = vmatprep.subr.bf16.mxu0 0
      %2113 = vmatpush1.bf16.msra.mxu0 0
      %2114 = vmatprep.subr.bf16.mxu0 0
      %2115 = vmatpush1.bf16.msra.mxu0 0
      %2116 = vmatprep.subr.bf16.mxu0 0
      %2117 = vmatpush1.bf16.msra.mxu0 0
      %2118 = vmatprep.subr.bf16.mxu0 0
      %2119 = vmatpush1.bf16.msra.mxu0 0
      %2120 = vmatprep.subr.bf16.mxu0 0
      %2121 = vmatpush1.bf16.msra.mxu0 0
      %2122 = vmatprep.mubr.bf16.mxu0 0
      %2123 = vmatmul.mubr.bf16.gmra.mrb[0].mxu0 %v2064
      %v2124 = vpop.f32.mrb[0].mxu0
      %v2125 = vadd.f32 0.0, %v2124
      %v2126 = vpop.f32.mrb[0].mxu0
      %v2127 = vpop.f32.mrb[0].mxu0
      %v2128 = vadd.f32 0.0, %v2127
      %v2129 = vpop.f32.mrb[0].mxu0
      %2130 = vmatprep.mubr.bf16.mxu0 0
      %2131 = vmatmul.mubr.bf16.gmra.mrb[0].mxu0 %v2067
      %v2132 = vpop.f32.mrb[0].mxu0
      %v2133 = vadd.f32 0.0, %v2132
      %v2134 = vpop.f32.mrb[0].mxu0
      %v2135 = vpop.f32.mrb[0].mxu0
      %v2136 = vadd.f32 0.0, %v2135
      %v2137 = vpop.f32.mrb[0].mxu0
      %2138 = vmatprep.mubr.bf16.mxu0 0
      %2139 = vmatmul.mubr.bf16.gmra.mrb[0].mxu0 %v2070
      %v2140 = vpop.f32.mrb[0].mxu0
      %v2141 = vadd.f32 0.0, %v2140
      %v2142 = vpop.f32.mrb[0].mxu0
      %v2143 = vpop.f32.mrb[0].mxu0
      %v2144 = vadd.f32 0.0, %v2143
      %v2145 = vpop.f32.mrb[0].mxu0
      %2146 = vmatprep.mubr.bf16.mxu0 0
      %2147 = vmatmul.mubr.bf16.gmra.mrb[0].mxu0 %v2073
      %v2148 = vpop.f32.mrb[0].mxu0
      %v2149 = vadd.f32 0.0, %v2148
      %v2150 = vpop.f32.mrb[0].mxu0
      %v2151 = vpop.f32.mrb[0].mxu0
      %v2152 = vadd.f32 0.0, %v2151
      %v2153 = vpop.f32.mrb[0].mxu0
      %2154 = vmatprep.mubr.bf16.mxu0 0
      %2155 = vmatmul.mubr.bf16.gmra.mrb[0].mxu0 %v2076
      %v2156 = vpop.f32.mrb[0].mxu0
      %v2157 = vadd.f32 0.0, %v2156
      %v2158 = vpop.f32.mrb[0].mxu0
      %v2159 = vpop.f32.mrb[0].mxu0
      %v2160 = vadd.f32 0.0, %v2159
      %v2161 = vpop.f32.mrb[0].mxu0
      %2162 = vmatprep.mubr.bf16.mxu0 0
      %2163 = vmatmul.mubr.bf16.gmra.mrb[0].mxu0 %v2079
      %v2164 = vpop.f32.mrb[0].mxu0
      %v2165 = vadd.f32 0.0, %v2164
      %v2166 = vpop.f32.mrb[0].mxu0
      %v2167 = vpop.f32.mrb[0].mxu0
      %v2168 = vadd.f32 0.0, %v2167
      %v2169 = vpop.f32.mrb[0].mxu0
      %2170 = vmatprep.mubr.bf16.mxu0 0
      %2171 = vmatmul.mubr.bf16.gmra.mrb[0].mxu0 %v2082
      %v2172 = vpop.f32.mrb[0].mxu0
      %v2173 = vadd.f32 0.0, %v2172
      %v2174 = vpop.f32.mrb[0].mxu0
      %v2175 = vpop.f32.mrb[0].mxu0
      %v2176 = vadd.f32 0.0, %v2175
      %v2177 = vpop.f32.mrb[0].mxu0
      %2178 = vmatprep.mubr.bf16.mxu0 0
      %2179 = vmatmul.mubr.bf16.gmra.mrb[0].mxu0 %v2085
      %v2180 = vpop.f32.mrb[0].mxu0
      %v2181 = vadd.f32 0.0, %v2180
      %v2182 = vpop.f32.mrb[0].mxu0
      %v2183 = vpop.f32.mrb[0].mxu0
      %v2184 = vadd.f32 0.0, %v2183
      %v2185 = vpop.f32.mrb[0].mxu0
      %2186 = vdwg.mxu0
      %v2187 = vadd.f32 %v1988, %v2125
      %v2188 = vadd.f32 %v1989, %v2128
      %v2189 = vadd.f32 %v1990, %v2133
      %v2190 = vadd.f32 %v1991, %v2136
      %v2191 = vadd.f32 %v1992, %v2141
      %v2192 = vadd.f32 %v1993, %v2144
      %v2193 = vadd.f32 %v1994, %v2149
      %v2194 = vadd.f32 %v1995, %v2152
      %v2195 = vadd.f32 %v1996, %v2157
      %v2196 = vadd.f32 %v1997, %v2160
      %v2197 = vadd.f32 %v1998, %v2165
      %v2198 = vadd.f32 %v1999, %v2168
      %v2199 = vadd.f32 %v2000, %v2173
      %v2200 = vadd.f32 %v2001, %v2176
      %v2201 = vadd.f32 %v2002, %v2181
      %v2202 = vadd.f32 %v2003, %v2184
      %v2203 = vld [vmem:[%s2004] sm:$0xf]
      %v2204 = vld [vmem:[%s2004 + $0x4] sm:$0xf]
      %v2205 = vld [vmem:[%s2004 + $0x8] sm:$0x1]
      %v2206 = vld [vmem:[%s2004 + $0xc] sm:$0xf]
      %v2207 = vld [vmem:[%s2004 + $0x10] sm:$0xf]
      %v2208 = vld [vmem:[%s2004 + $0x14] sm:$0x1]
      %v2209 = vld [vmem:[%s2004 + $0x18] sm:$0xf]
      %v2210 = vld [vmem:[%s2004 + $0x1c] sm:$0xf]
      %v2211 = vld [vmem:[%s2004 + $0x20] sm:$0x1]
      %v2212 = vld [vmem:[%s2004 + $0x24] sm:$0xf]
      %v2213 = vld [vmem:[%s2004 + $0x28] sm:$0xf]
      %v2214 = vld [vmem:[%s2004 + $0x2c] sm:$0x1]
      %v2215 = vld [vmem:[%s2004 + $0x30] sm:$0xf]
      %v2216 = vld [vmem:[%s2004 + $0x34] sm:$0xf]
      %v2217 = vld [vmem:[%s2004 + $0x38] sm:$0x1]
      %v2218 = vld [vmem:[%s2004 + $0x3c] sm:$0xf]
      %v2219 = vld [vmem:[%s2004 + $0x40] sm:$0xf]
      %v2220 = vld [vmem:[%s2004 + $0x44] sm:$0x1]
      %v2221 = vld [vmem:[%s2004 + $0x48] sm:$0xf]
      %v2222 = vld [vmem:[%s2004 + $0x4c] sm:$0xf]
      %v2223 = vld [vmem:[%s2004 + $0x50] sm:$0x1]
      %v2224 = vld [vmem:[%s2004 + $0x54] sm:$0xf]
      %v2225 = vld [vmem:[%s2004 + $0x58] sm:$0xf]
      %v2226 = vld [vmem:[%s2004 + $0x5c] sm:$0x1]
      %v2228 = vshrl.u32 %v2203, 16
      %v2230 = vrot.slane %v2228, 4
      %v2231 = vshll.u32 %v2203, 16
      %v2233 = vrot.slane %v2231, 5
      %v2234 = vor.u32 %v2230, %v2233
      %v2235 = vrot.slane %v2234, 4
      %v2237 = vshll.u32 %v2204, 16
      %v2239 = vrot.slane %v2237, 5
      %v2240 = vsel %vm411, %v2235, %v2239
      %v2241 = vshrl.u32 %v2204, 16
      %v2243 = vrot.slane %v2241, 4
      %v2244 = vor.u32 %v2243, %v2239
      %v2245 = vrot.slane %v2244, 4
      %v2247 = vshll.u32 %v2205, 16
      %v2249 = vrot.slane %v2247, 5
      %v2250 = vsel %vm411, %v2245, %v2249
      %v2252 = vshrl.u32 %v2206, 16
      %v2254 = vrot.slane %v2252, 4
      %v2255 = vshll.u32 %v2206, 16
      %v2257 = vrot.slane %v2255, 5
      %v2258 = vor.u32 %v2254, %v2257
      %v2259 = vrot.slane %v2258, 4
      %v2261 = vshll.u32 %v2207, 16
      %v2263 = vrot.slane %v2261, 5
      %v2264 = vsel %vm411, %v2259, %v2263
      %v2265 = vshrl.u32 %v2207, 16
      %v2267 = vrot.slane %v2265, 4
      %v2268 = vor.u32 %v2267, %v2263
      %v2269 = vrot.slane %v2268, 4
      %v2271 = vshll.u32 %v2208, 16
      %v2273 = vrot.slane %v2271, 5
      %v2274 = vsel %vm411, %v2269, %v2273
      %v2276 = vshrl.u32 %v2209, 16
      %v2278 = vrot.slane %v2276, 4
      %v2279 = vshll.u32 %v2209, 16
      %v2281 = vrot.slane %v2279, 5
      %v2282 = vor.u32 %v2278, %v2281
      %v2283 = vrot.slane %v2282, 4
      %v2285 = vshll.u32 %v2210, 16
      %v2287 = vrot.slane %v2285, 5
      %v2288 = vsel %vm411, %v2283, %v2287
      %v2289 = vshrl.u32 %v2210, 16
      %v2291 = vrot.slane %v2289, 4
      %v2292 = vor.u32 %v2291, %v2287
      %v2293 = vrot.slane %v2292, 4
      %v2295 = vshll.u32 %v2211, 16
      %v2297 = vrot.slane %v2295, 5
      %v2298 = vsel %vm411, %v2293, %v2297
      %v2300 = vshrl.u32 %v2212, 16
      %v2302 = vrot.slane %v2300, 4
      %v2303 = vshll.u32 %v2212, 16
      %v2305 = vrot.slane %v2303, 5
      %v2306 = vor.u32 %v2302, %v2305
      %v2307 = vrot.slane %v2306, 4
      %v2309 = vshll.u32 %v2213, 16
      %v2311 = vrot.slane %v2309, 5
      %v2312 = vsel %vm411, %v2307, %v2311
      %v2313 = vshrl.u32 %v2213, 16
      %v2315 = vrot.slane %v2313, 4
      %v2316 = vor.u32 %v2315, %v2311
      %v2317 = vrot.slane %v2316, 4
      %v2319 = vshll.u32 %v2214, 16
      %v2321 = vrot.slane %v2319, 5
      %v2322 = vsel %vm411, %v2317, %v2321
      %v2324 = vshrl.u32 %v2215, 16
      %v2326 = vrot.slane %v2324, 4
      %v2327 = vshll.u32 %v2215, 16
      %v2329 = vrot.slane %v2327, 5
      %v2330 = vor.u32 %v2326, %v2329
      %v2331 = vrot.slane %v2330, 4
      %v2333 = vshll.u32 %v2216, 16
      %v2335 = vrot.slane %v2333, 5
      %v2336 = vsel %vm411, %v2331, %v2335
      %v2337 = vshrl.u32 %v2216, 16
      %v2339 = vrot.slane %v2337, 4
      %v2340 = vor.u32 %v2339, %v2335
      %v2341 = vrot.slane %v2340, 4
      %v2343 = vshll.u32 %v2217, 16
      %v2345 = vrot.slane %v2343, 5
      %v2346 = vsel %vm411, %v2341, %v2345
      %v2348 = vshrl.u32 %v2218, 16
      %v2350 = vrot.slane %v2348, 4
      %v2351 = vshll.u32 %v2218, 16
      %v2353 = vrot.slane %v2351, 5
      %v2354 = vor.u32 %v2350, %v2353
      %v2355 = vrot.slane %v2354, 4
      %v2357 = vshll.u32 %v2219, 16
      %v2359 = vrot.slane %v2357, 5
      %v2360 = vsel %vm411, %v2355, %v2359
      %v2361 = vshrl.u32 %v2219, 16
      %v2363 = vrot.slane %v2361, 4
      %v2364 = vor.u32 %v2363, %v2359
      %v2365 = vrot.slane %v2364, 4
      %v2367 = vshll.u32 %v2220, 16
      %v2369 = vrot.slane %v2367, 5
      %v2370 = vsel %vm411, %v2365, %v2369
      %v2372 = vshrl.u32 %v2221, 16
      %v2374 = vrot.slane %v2372, 4
      %v2375 = vshll.u32 %v2221, 16
      %v2377 = vrot.slane %v2375, 5
      %v2378 = vor.u32 %v2374, %v2377
      %v2379 = vrot.slane %v2378, 4
      %v2381 = vshll.u32 %v2222, 16
      %v2383 = vrot.slane %v2381, 5
      %v2384 = vsel %vm411, %v2379, %v2383
      %v2385 = vshrl.u32 %v2222, 16
      %v2387 = vrot.slane %v2385, 4
      %v2388 = vor.u32 %v2387, %v2383
      %v2389 = vrot.slane %v2388, 4
      %v2391 = vshll.u32 %v2223, 16
      %v2393 = vrot.slane %v2391, 5
      %v2394 = vsel %vm411, %v2389, %v2393
      %v2396 = vshrl.u32 %v2224, 16
      %v2398 = vrot.slane %v2396, 4
      %v2399 = vshll.u32 %v2224, 16
      %v2401 = vrot.slane %v2399, 5
      %v2402 = vor.u32 %v2398, %v2401
      %v2403 = vrot.slane %v2402, 4
      %v2405 = vshll.u32 %v2225, 16
      %v2407 = vrot.slane %v2405, 5
      %v2408 = vsel %vm411, %v2403, %v2407
      %v2409 = vshrl.u32 %v2225, 16
      %v2411 = vrot.slane %v2409, 4
      %v2412 = vor.u32 %v2411, %v2407
      %v2413 = vrot.slane %v2412, 4
      %v2415 = vshll.u32 %v2226, 16
      %v2417 = vrot.slane %v2415, 5
      %v2418 = vsel %vm411, %v2413, %v2417
      %s2419 = scalar_lea.vmem %s2, 14
      %v2420 = vld [vmem:[%s2419] sm:$0x3]
      %v2421 = vunpack.c.l.b16 %v2240
      %v2422 = vunpack.c.l.b16 %v2250
      %v2423 = vunpack.c.l.b16 %v2264
      %v2424 = vunpack.c.l.b16 %v2274
      %v2425 = vunpack.c.l.b16 %v2288
      %v2426 = vunpack.c.l.b16 %v2298
      %v2427 = vunpack.c.l.b16 %v2312
      %v2428 = vunpack.c.l.b16 %v2322
      %v2429 = vunpack.c.l.b16 %v2336
      %v2430 = vunpack.c.l.b16 %v2346
      %v2431 = vunpack.c.l.b16 %v2360
      %v2432 = vunpack.c.l.b16 %v2370
      %v2433 = vunpack.c.l.b16 %v2384
      %v2434 = vunpack.c.l.b16 %v2394
      %v2435 = vunpack.c.l.b16 %v2408
      %v2436 = vunpack.c.l.b16 %v2418
      %v2437 = vpack.c.b16 %v2422, %v2421
      %v2438 = vpack.c.b16 %v2424, %v2423
      %v2439 = vpack.c.b16 %v2426, %v2425
      %v2440 = vpack.c.b16 %v2428, %v2427
      %v2441 = vpack.c.b16 %v2430, %v2429
      %v2442 = vpack.c.b16 %v2432, %v2431
      %v2443 = vpack.c.b16 %v2434, %v2433
      %v2444 = vpack.c.b16 %v2436, %v2435
      %v2446 = vsel %vm630, %v2437, 0
      %v2449 = vsel %vm630, %v2438, 0
      %v2452 = vsel %vm630, %v2439, 0
      %v2455 = vsel %vm630, %v2440, 0
      %v2458 = vsel %vm630, %v2441, 0
      %v2461 = vsel %vm630, %v2442, 0
      %v2464 = vsel %vm630, %v2443, 0
      %v2467 = vsel %vm630, %v2444, 0
      %v2470 = vsel %vm655, %v2420, 0
      %2472 = vmatprep.subr.bf16.mxu0 0
      %2473 = vmatpush1.bf16.msra.mxu0 %v2470
      %2474 = vmatprep.subr.bf16.mxu0 0
      %2475 = vmatpush1.bf16.msra.mxu0 0
      %2476 = vmatprep.subr.bf16.mxu0 0
      %2477 = vmatpush1.bf16.msra.mxu0 0
      %2478 = vmatprep.subr.bf16.mxu0 0
      %2479 = vmatpush1.bf16.msra.mxu0 0
      %2480 = vmatprep.subr.bf16.mxu0 0
      %2481 = vmatpush1.bf16.msra.mxu0 0
      %2482 = vmatprep.subr.bf16.mxu0 0
      %2483 = vmatpush1.bf16.msra.mxu0 0
      %2484 = vmatprep.subr.bf16.mxu0 0
      %2485 = vmatpush1.bf16.msra.mxu0 0
      %2486 = vmatprep.subr.bf16.mxu0 0
      %2487 = vmatpush1.bf16.msra.mxu0 0
      %2488 = vmatprep.subr.bf16.mxu0 0
      %2489 = vmatpush1.bf16.msra.mxu0 0
      %2490 = vmatprep.subr.bf16.mxu0 0
      %2491 = vmatpush1.bf16.msra.mxu0 0
      %2492 = vmatprep.subr.bf16.mxu0 0
      %2493 = vmatpush1.bf16.msra.mxu0 0
      %2494 = vmatprep.subr.bf16.mxu0 0
      %2495 = vmatpush1.bf16.msra.mxu0 0
      %2496 = vmatprep.subr.bf16.mxu0 0
      %2497 = vmatpush1.bf16.msra.mxu0 0
      %2498 = vmatprep.subr.bf16.mxu0 0
      %2499 = vmatpush1.bf16.msra.mxu0 0
      %2500 = vmatprep.subr.bf16.mxu0 0
      %2501 = vmatpush1.bf16.msra.mxu0 0
      %2502 = vmatprep.subr.bf16.mxu0 0
      %2503 = vmatpush1.bf16.msra.mxu0 0
      %2504 = vmatprep.mubr.bf16.mxu0 0
      %2505 = vmatmul.mubr.bf16.gmra.mrb[0].mxu0 %v2446
      %v2506 = vpop.f32.mrb[0].mxu0
      %v2507 = vadd.f32 0.0, %v2506
      %v2508 = vpop.f32.mrb[0].mxu0
      %v2509 = vpop.f32.mrb[0].mxu0
      %v2510 = vadd.f32 0.0, %v2509
      %v2511 = vpop.f32.mrb[0].mxu0
      %2512 = vmatprep.mubr.bf16.mxu0 0
      %2513 = vmatmul.mubr.bf16.gmra.mrb[0].mxu0 %v2449
      %v2514 = vpop.f32.mrb[0].mxu0
      %v2515 = vadd.f32 0.0, %v2514
      %v2516 = vpop.f32.mrb[0].mxu0
      %v2517 = vpop.f32.mrb[0].mxu0
      %v2518 = vadd.f32 0.0, %v2517
      %v2519 = vpop.f32.mrb[0].mxu0
      %2520 = vmatprep.mubr.bf16.mxu0 0
      %2521 = vmatmul.mubr.bf16.gmra.mrb[0].mxu0 %v2452
      %v2522 = vpop.f32.mrb[0].mxu0
      %v2523 = vadd.f32 0.0, %v2522
      %v2524 = vpop.f32.mrb[0].mxu0
      %v2525 = vpop.f32.mrb[0].mxu0
      %v2526 = vadd.f32 0.0, %v2525
      %v2527 = vpop.f32.mrb[0].mxu0
      %2528 = vmatprep.mubr.bf16.mxu0 0
      %2529 = vmatmul.mubr.bf16.gmra.mrb[0].mxu0 %v2455
      %v2530 = vpop.f32.mrb[0].mxu0
      %v2531 = vadd.f32 0.0, %v2530
      %v2532 = vpop.f32.mrb[0].mxu0
      %v2533 = vpop.f32.mrb[0].mxu0
      %v2534 = vadd.f32 0.0, %v2533
      %v2535 = vpop.f32.mrb[0].mxu0
      %2536 = vmatprep.mubr.bf16.mxu0 0
      %2537 = vmatmul.mubr.bf16.gmra.mrb[0].mxu0 %v2458
      %v2538 = vpop.f32.mrb[0].mxu0
      %v2539 = vadd.f32 0.0, %v2538
      %v2540 = vpop.f32.mrb[0].mxu0
      %v2541 = vpop.f32.mrb[0].mxu0
      %v2542 = vadd.f32 0.0, %v2541
      %v2543 = vpop.f32.mrb[0].mxu0
      %2544 = vmatprep.mubr.bf16.mxu0 0
      %2545 = vmatmul.mubr.bf16.gmra.mrb[0].mxu0 %v2461
      %v2546 = vpop.f32.mrb[0].mxu0
      %v2547 = vadd.f32 0.0, %v2546
      %v2548 = vpop.f32.mrb[0].mxu0
      %v2549 = vpop.f32.mrb[0].mxu0
      %v2550 = vadd.f32 0.0, %v2549
      %v2551 = vpop.f32.mrb[0].mxu0
      %2552 = vmatprep.mubr.bf16.mxu0 0
      %2553 = vmatmul.mubr.bf16.gmra.mrb[0].mxu0 %v2464
      %v2554 = vpop.f32.mrb[0].mxu0
      %v2555 = vadd.f32 0.0, %v2554
      %v2556 = vpop.f32.mrb[0].mxu0
      %v2557 = vpop.f32.mrb[0].mxu0
      %v2558 = vadd.f32 0.0, %v2557
      %v2559 = vpop.f32.mrb[0].mxu0
      %2560 = vmatprep.mubr.bf16.mxu0 0
      %2561 = vmatmul.mubr.bf16.gmra.mrb[0].mxu0 %v2467
      %v2562 = vpop.f32.mrb[0].mxu0
      %v2563 = vadd.f32 0.0, %v2562
      %v2564 = vpop.f32.mrb[0].mxu0
      %v2565 = vpop.f32.mrb[0].mxu0
      %v2566 = vadd.f32 0.0, %v2565
      %v2567 = vpop.f32.mrb[0].mxu0
      %2568 = vdwg.mxu0
      %v2569 = vadd.f32 %v2187, %v2507
      %v2570 = vadd.f32 %v2188, %v2510
      %v2571 = vadd.f32 %v2189, %v2515
      %v2572 = vadd.f32 %v2190, %v2518
      %v2573 = vadd.f32 %v2191, %v2523
      %v2574 = vadd.f32 %v2192, %v2526
      %v2575 = vadd.f32 %v2193, %v2531
      %v2576 = vadd.f32 %v2194, %v2534
      %v2577 = vadd.f32 %v2195, %v2539
      %v2578 = vadd.f32 %v2196, %v2542
      %v2579 = vadd.f32 %v2197, %v2547
      %v2580 = vadd.f32 %v2198, %v2550
      %v2581 = vadd.f32 %v2199, %v2555
      %v2582 = vadd.f32 %v2200, %v2558
      %v2583 = vadd.f32 %v2201, %v2563
      %v2584 = vadd.f32 %v2202, %v2566
      %v2585 = vld [vmem:[%s2004] sm:$0xe]
      %v2586 = vld [vmem:[%s2004 + $0xc] sm:$0xe]
      %v2587 = vld [vmem:[%s2004 + $0x18] sm:$0xe]
      %v2588 = vld [vmem:[%s2004 + $0x24] sm:$0xe]
      %v2589 = vld [vmem:[%s2004 + $0x30] sm:$0xe]
      %v2590 = vld [vmem:[%s2004 + $0x3c] sm:$0xe]
      %v2591 = vld [vmem:[%s2004 + $0x48] sm:$0xe]
      %v2592 = vld [vmem:[%s2004 + $0x54] sm:$0xe]
      %v2617 = vrot.slane %v2585, 5
      %v2618 = vrot.slane %v2617, 4
      %v2619 = vrot.slane %v2204, 5
      %v2620 = vsel %vm946, %v2618, %v2619
      %v2621 = vrot.slane %v2619, 4
      %v2622 = vrot.slane %v2205, 5
      %v2623 = vsel %vm946, %v2621, %v2622
      %v2624 = vrot.slane %v2586, 5
      %v2625 = vrot.slane %v2624, 4
      %v2626 = vrot.slane %v2207, 5
      %v2627 = vsel %vm946, %v2625, %v2626
      %v2628 = vrot.slane %v2626, 4
      %v2629 = vrot.slane %v2208, 5
      %v2630 = vsel %vm946, %v2628, %v2629
      %v2631 = vrot.slane %v2587, 5
      %v2632 = vrot.slane %v2631, 4
      %v2633 = vrot.slane %v2210, 5
      %v2634 = vsel %vm946, %v2632, %v2633
      %v2635 = vrot.slane %v2633, 4
      %v2636 = vrot.slane %v2211, 5
      %v2637 = vsel %vm946, %v2635, %v2636
      %v2638 = vrot.slane %v2588, 5
      %v2639 = vrot.slane %v2638, 4
      %v2640 = vrot.slane %v2213, 5
      %v2641 = vsel %vm946, %v2639, %v2640
      %v2642 = vrot.slane %v2640, 4
      %v2643 = vrot.slane %v2214, 5
      %v2644 = vsel %vm946, %v2642, %v2643
      %v2645 = vrot.slane %v2589, 5
      %v2646 = vrot.slane %v2645, 4
      %v2647 = vrot.slane %v2216, 5
      %v2648 = vsel %vm946, %v2646, %v2647
      %v2649 = vrot.slane %v2647, 4
      %v2650 = vrot.slane %v2217, 5
      %v2651 = vsel %vm946, %v2649, %v2650
      %v2652 = vrot.slane %v2590, 5
      %v2653 = vrot.slane %v2652, 4
      %v2654 = vrot.slane %v2219, 5
      %v2655 = vsel %vm946, %v2653, %v2654
      %v2656 = vrot.slane %v2654, 4
      %v2657 = vrot.slane %v2220, 5
      %v2658 = vsel %vm946, %v2656, %v2657
      %v2659 = vrot.slane %v2591, 5
      %v2660 = vrot.slane %v2659, 4
      %v2661 = vrot.slane %v2222, 5
      %v2662 = vsel %vm946, %v2660, %v2661
      %v2663 = vrot.slane %v2661, 4
      %v2664 = vrot.slane %v2223, 5
      %v2665 = vsel %vm946, %v2663, %v2664
      %v2666 = vrot.slane %v2592, 5
      %v2667 = vrot.slane %v2666, 4
      %v2668 = vrot.slane %v2225, 5
      %v2669 = vsel %vm946, %v2667, %v2668
      %v2670 = vrot.slane %v2668, 4
      %v2671 = vrot.slane %v2226, 5
      %v2672 = vsel %vm946, %v2670, %v2671
      %s2673 = scalar_lea.vmem %s2, 16
      %v2674 = vld [vmem:[%s2673] sm:$0x3]
      %v2675 = vunpack.c.l.b16 %v2620
      %v2676 = vunpack.c.l.b16 %v2623
      %v2677 = vunpack.c.l.b16 %v2627
      %v2678 = vunpack.c.l.b16 %v2630
      %v2679 = vunpack.c.l.b16 %v2634
      %v2680 = vunpack.c.l.b16 %v2637
      %v2681 = vunpack.c.l.b16 %v2641
      %v2682 = vunpack.c.l.b16 %v2644
      %v2683 = vunpack.c.l.b16 %v2648
      %v2684 = vunpack.c.l.b16 %v2651
      %v2685 = vunpack.c.l.b16 %v2655
      %v2686 = vunpack.c.l.b16 %v2658
      %v2687 = vunpack.c.l.b16 %v2662
      %v2688 = vunpack.c.l.b16 %v2665
      %v2689 = vunpack.c.l.b16 %v2669
      %v2690 = vunpack.c.l.b16 %v2672
      %v2691 = vpack.c.b16 %v2676, %v2675
      %v2692 = vpack.c.b16 %v2678, %v2677
      %v2693 = vpack.c.b16 %v2680, %v2679
      %v2694 = vpack.c.b16 %v2682, %v2681
      %v2695 = vpack.c.b16 %v2684, %v2683
      %v2696 = vpack.c.b16 %v2686, %v2685
      %v2697 = vpack.c.b16 %v2688, %v2687
      %v2698 = vpack.c.b16 %v2690, %v2689
      %v2700 = vsel %vm630, %v2691, 0
      %v2703 = vsel %vm630, %v2692, 0
      %v2706 = vsel %vm630, %v2693, 0
      %v2709 = vsel %vm630, %v2694, 0
      %v2712 = vsel %vm630, %v2695, 0
      %v2715 = vsel %vm630, %v2696, 0
      %v2718 = vsel %vm630, %v2697, 0
      %v2721 = vsel %vm630, %v2698, 0
      %v2724 = vsel %vm655, %v2674, 0
      %2726 = vmatprep.subr.bf16.mxu0 0
      %2727 = vmatpush1.bf16.msra.mxu0 %v2724
      %2728 = vmatprep.subr.bf16.mxu0 0
      %2729 = vmatpush1.bf16.msra.mxu0 0
      %2730 = vmatprep.subr.bf16.mxu0 0
      %2731 = vmatpush1.bf16.msra.mxu0 0
      %2732 = vmatprep.subr.bf16.mxu0 0
      %2733 = vmatpush1.bf16.msra.mxu0 0
      %2734 = vmatprep.subr.bf16.mxu0 0
      %2735 = vmatpush1.bf16.msra.mxu0 0
      %2736 = vmatprep.subr.bf16.mxu0 0
      %2737 = vmatpush1.bf16.msra.mxu0 0
      %2738 = vmatprep.subr.bf16.mxu0 0
      %2739 = vmatpush1.bf16.msra.mxu0 0
      %2740 = vmatprep.subr.bf16.mxu0 0
      %2741 = vmatpush1.bf16.msra.mxu0 0
      %2742 = vmatprep.subr.bf16.mxu0 0
      %2743 = vmatpush1.bf16.msra.mxu0 0
      %2744 = vmatprep.subr.bf16.mxu0 0
      %2745 = vmatpush1.bf16.msra.mxu0 0
      %2746 = vmatprep.subr.bf16.mxu0 0
      %2747 = vmatpush1.bf16.msra.mxu0 0
      %2748 = vmatprep.subr.bf16.mxu0 0
      %2749 = vmatpush1.bf16.msra.mxu0 0
      %2750 = vmatprep.subr.bf16.mxu0 0
      %2751 = vmatpush1.bf16.msra.mxu0 0
      %2752 = vmatprep.subr.bf16.mxu0 0
      %2753 = vmatpush1.bf16.msra.mxu0 0
      %2754 = vmatprep.subr.bf16.mxu0 0
      %2755 = vmatpush1.bf16.msra.mxu0 0
      %2756 = vmatprep.subr.bf16.mxu0 0
      %2757 = vmatpush1.bf16.msra.mxu0 0
      %2758 = vmatprep.mubr.bf16.mxu0 0
      %2759 = vmatmul.mubr.bf16.gmra.mrb[0].mxu0 %v2700
      %v2760 = vpop.f32.mrb[0].mxu0
      %v2761 = vadd.f32 0.0, %v2760
      %v2762 = vpop.f32.mrb[0].mxu0
      %v2763 = vpop.f32.mrb[0].mxu0
      %v2764 = vadd.f32 0.0, %v2763
      %v2765 = vpop.f32.mrb[0].mxu0
      %2766 = vmatprep.mubr.bf16.mxu0 0
      %2767 = vmatmul.mubr.bf16.gmra.mrb[0].mxu0 %v2703
      %v2768 = vpop.f32.mrb[0].mxu0
      %v2769 = vadd.f32 0.0, %v2768
      %v2770 = vpop.f32.mrb[0].mxu0
      %v2771 = vpop.f32.mrb[0].mxu0
      %v2772 = vadd.f32 0.0, %v2771
      %v2773 = vpop.f32.mrb[0].mxu0
      %2774 = vmatprep.mubr.bf16.mxu0 0
      %2775 = vmatmul.mubr.bf16.gmra.mrb[0].mxu0 %v2706
      %v2776 = vpop.f32.mrb[0].mxu0
      %v2777 = vadd.f32 0.0, %v2776
      %v2778 = vpop.f32.mrb[0].mxu0
      %v2779 = vpop.f32.mrb[0].mxu0
      %v2780 = vadd.f32 0.0, %v2779
      %v2781 = vpop.f32.mrb[0].mxu0
      %2782 = vmatprep.mubr.bf16.mxu0 0
      %2783 = vmatmul.mubr.bf16.gmra.mrb[0].mxu0 %v2709
      %v2784 = vpop.f32.mrb[0].mxu0
      %v2785 = vadd.f32 0.0, %v2784
      %v2786 = vpop.f32.mrb[0].mxu0
      %v2787 = vpop.f32.mrb[0].mxu0
      %v2788 = vadd.f32 0.0, %v2787
      %v2789 = vpop.f32.mrb[0].mxu0
      %2790 = vmatprep.mubr.bf16.mxu0 0
      %2791 = vmatmul.mubr.bf16.gmra.mrb[0].mxu0 %v2712
      %v2792 = vpop.f32.mrb[0].mxu0
      %v2793 = vadd.f32 0.0, %v2792
      %v2794 = vpop.f32.mrb[0].mxu0
      %v2795 = vpop.f32.mrb[0].mxu0
      %v2796 = vadd.f32 0.0, %v2795
      %v2797 = vpop.f32.mrb[0].mxu0
      %2798 = vmatprep.mubr.bf16.mxu0 0
      %2799 = vmatmul.mubr.bf16.gmra.mrb[0].mxu0 %v2715
      %v2800 = vpop.f32.mrb[0].mxu0
      %v2801 = vadd.f32 0.0, %v2800
      %v2802 = vpop.f32.mrb[0].mxu0
      %v2803 = vpop.f32.mrb[0].mxu0
      %v2804 = vadd.f32 0.0, %v2803
      %v2805 = vpop.f32.mrb[0].mxu0
      %2806 = vmatprep.mubr.bf16.mxu0 0
      %2807 = vmatmul.mubr.bf16.gmra.mrb[0].mxu0 %v2718
      %v2808 = vpop.f32.mrb[0].mxu0
      %v2809 = vadd.f32 0.0, %v2808
      %v2810 = vpop.f32.mrb[0].mxu0
      %v2811 = vpop.f32.mrb[0].mxu0
      %v2812 = vadd.f32 0.0, %v2811
      %v2813 = vpop.f32.mrb[0].mxu0
      %2814 = vmatprep.mubr.bf16.mxu0 0
      %2815 = vmatmul.mubr.bf16.gmra.mrb[0].mxu0 %v2721
      %v2816 = vpop.f32.mrb[0].mxu0
      %v2817 = vadd.f32 0.0, %v2816
      %v2818 = vpop.f32.mrb[0].mxu0
      %v2819 = vpop.f32.mrb[0].mxu0
      %v2820 = vadd.f32 0.0, %v2819
      %v2821 = vpop.f32.mrb[0].mxu0
      %2822 = vdwg.mxu0
      %v2823 = vadd.f32 %v2569, %v2761
      %v2824 = vadd.f32 %v2570, %v2764
      %v2825 = vadd.f32 %v2571, %v2769
      %v2826 = vadd.f32 %v2572, %v2772
      %v2827 = vadd.f32 %v2573, %v2777
      %v2828 = vadd.f32 %v2574, %v2780
      %v2829 = vadd.f32 %v2575, %v2785
      %v2830 = vadd.f32 %v2576, %v2788
      %v2831 = vadd.f32 %v2577, %v2793
      %v2832 = vadd.f32 %v2578, %v2796
      %v2833 = vadd.f32 %v2579, %v2801
      %v2834 = vadd.f32 %v2580, %v2804
      %v2835 = vadd.f32 %v2581, %v2809
      %v2836 = vadd.f32 %v2582, %v2812
      %v2837 = vadd.f32 %v2583, %v2817
      %v2838 = vadd.f32 %v2584, %v2820
      %v2839 = vld [vmem:[%s3] sm:$0x1]
      %v2841 = vlaneseq
      %v2842 = vshrl.u32 %v2841, 7
      %v2843 = vsub.s32 0, %v2842
      %v2844 = vrot.slane %v2839, %v2843
      %v2846 = vadd.f32 %v2823, %v2844
      %v2847 = vadd.f32 %v2824, %v2844
      %v2848 = vadd.f32 %v2825, %v2844
      %v2849 = vadd.f32 %v2826, %v2844
      %v2850 = vadd.f32 %v2827, %v2844
      %v2851 = vadd.f32 %v2828, %v2844
      %v2852 = vadd.f32 %v2829, %v2844
      %v2853 = vadd.f32 %v2830, %v2844
      %v2854 = vadd.f32 %v2831, %v2844
      %v2855 = vadd.f32 %v2832, %v2844
      %v2856 = vadd.f32 %v2833, %v2844
      %v2857 = vadd.f32 %v2834, %v2844
      %v2858 = vadd.f32 %v2835, %v2844
      %v2859 = vadd.f32 %v2836, %v2844
      %v2860 = vadd.f32 %v2837, %v2844
      %v2861 = vadd.f32 %v2838, %v2844
      %v2862 = vmul.f32 %v2846, 0.2
      %v2863 = vmul.f32 %v2847, 0.2
      %v2864 = vmul.f32 %v2848, 0.2
      %v2865 = vmul.f32 %v2849, 0.2
      %v2866 = vmul.f32 %v2850, 0.2
      %v2867 = vmul.f32 %v2851, 0.2
      %v2868 = vmul.f32 %v2852, 0.2
      %v2869 = vmul.f32 %v2853, 0.2
      %v2870 = vmul.f32 %v2854, 0.2
      %v2871 = vmul.f32 %v2855, 0.2
      %v2872 = vmul.f32 %v2856, 0.2
      %v2873 = vmul.f32 %v2857, 0.2
      %v2874 = vmul.f32 %v2858, 0.2
      %v2875 = vmul.f32 %v2859, 0.2
      %v2876 = vmul.f32 %v2860, 0.2
      %v2877 = vmul.f32 %v2861, 0.2
      %v2878 = vmax.f32 %v2846, %v2862
      %v2879 = vmax.f32 %v2847, %v2863
      %v2880 = vmax.f32 %v2848, %v2864
      %v2881 = vmax.f32 %v2849, %v2865
      %v2882 = vmax.f32 %v2850, %v2866
      %v2883 = vmax.f32 %v2851, %v2867
      %v2884 = vmax.f32 %v2852, %v2868
      %v2885 = vmax.f32 %v2853, %v2869
      %v2886 = vmax.f32 %v2854, %v2870
      %v2887 = vmax.f32 %v2855, %v2871
      %v2888 = vmax.f32 %v2856, %v2872
      %v2889 = vmax.f32 %v2857, %v2873
      %v2890 = vmax.f32 %v2858, %v2874
      %v2891 = vmax.f32 %v2859, %v2875
      %v2892 = vmax.f32 %v2860, %v2876
      %v2893 = vmax.f32 %v2861, %v2877
      %2894 = vst [vmem:[%s318] sm:$0xff] %v2878
      %2895 = vst [vmem:[%s318 + $0x8] sm:$0xff] %v2879
      %2896 = vst [vmem:[%s318 + $0x10] sm:$0xff] %v2880
      %2897 = vst [vmem:[%s318 + $0x18] sm:$0xff] %v2881
      %2898 = vst [vmem:[%s318 + $0x20] sm:$0xff] %v2882
      %2899 = vst [vmem:[%s318 + $0x28] sm:$0xff] %v2883
      %2900 = vst [vmem:[%s318 + $0x30] sm:$0xff] %v2884
      %2901 = vst [vmem:[%s318 + $0x38] sm:$0xff] %v2885
      %2902 = vst [vmem:[%s318 + $0x40] sm:$0xff] %v2886
      %2903 = vst [vmem:[%s318 + $0x48] sm:$0xff] %v2887
      %2904 = vst [vmem:[%s318 + $0x50] sm:$0xff] %v2888
      %2905 = vst [vmem:[%s318 + $0x58] sm:$0xff] %v2889
      %2906 = vst [vmem:[%s318 + $0x60] sm:$0xff] %v2890
      %2907 = vst [vmem:[%s318 + $0x68] sm:$0xff] %v2891
      %2908 = vst [vmem:[%s318 + $0x70] sm:$0xff] %v2892
      %2909 = vst [vmem:[%s318 + $0x78] sm:$0xff] %v2893
      %s2910 = smul.u32 8, %s20
      %p2911 = scmp.lt.s32.totalorder %s19, 1
      %s2912 = scalar_select %p2911, %s19, 1
      %p2913 = scmp.lt.s32.totalorder %s2910, 15
      %s2914 = scalar_select %p2913, %s2910, 15
      %s2915 = smul.addr %s2914, 2
      %s2916 = smul.addr %s2912, 32
      %s2917 = sadd.s32 %s2915, %s2916
      %s2918 = smul.addr %s2917, 8
      %s2919 = scalar_lea.vmem %s4, %s2918
      // Predicated region
      $region37: #{conv_block.1} parent=35 // pred_check
        %p2920 = pneg %p149
      $region38: #{conv_block.1} parent=35 // pred_check_branch
        %2922 = sbr.rel (%p2920) target = $region40
      $region39: #{conv_block.1} parent=35 // pred_region
        %s2923 = smul.u32 8, %s20
      $region40: #{conv_block.1} parent=35 // pred_fallthru
        _
    $region36: #{conv_block.1} parent=5 // pred_fallthru
      _
    %p2924 = scmp.le.s32.totalorder 2, %s10
    // Predicated region
    $region41: #{conv_block.1} parent=5 // pred_check
      %p2925 = pneg %p2924
    $region42: #{conv_block.1} parent=5 // pred_check_branch
      %2927 = sbr.rel (%p2925) target = $region44
    $region43: #{conv_block.1} parent=5 // pred_region
      %s2928 = ssub.s32 %s10, 2
      // Predicated region
      $region45: #{conv_block.1} parent=43 // pred_check
        %p2929 = pneg %p155
      $region46: #{conv_block.1} parent=43 // pred_check_branch
        %2931 = sbr.rel (%p2929) target = $region48
      $region47: #{conv_block.1} parent=43 // pred_region
        %s2932 = smul.u32 8, %s22
        %p2933 = scmp.lt.s32.totalorder %s21, 1
        %s2934 = scalar_select %p2933, %s21, 1
        %p2935 = scmp.lt.s32.totalorder %s2932, 15
        %s2936 = scalar_select %p2935, %s2932, 15
        %s2937 = smul.addr %s2936, 2
        %s2938 = smul.addr %s2934, 32
        %s2939 = sadd.s32 %s2937, %s2938
        %s2940 = smul.addr %s2939, 8
        %s2941 = scalar_lea.vmem %s4, %s2940
      $region48: #{conv_block.1} parent=43 // pred_fallthru
        _
    $region44: #{conv_block.1} parent=5 // pred_fallthru
      _
  $region6: #{conv_block.1} parent=0 // loop_footer
    %s14 = sadd.s32 1, %s10
  $region7: #{conv_block.1} parent=0 // loop_footer_branch
    %9 = sbr.rel target = $region3
  $region8: #{conv_block.1} parent=0 // loop_exit
    _

</llo_original>
